<compile_context>
chip_gen: v7x
topology: tpu7x:2x2x1
jax: 0.10.0
libtpu: 0.0.40
codegen_flags: <defaults>
</compile_context>

<pallas_src>
import math

import jax
import jax.numpy as jnp
from jax.experimental import pallas as pl
from jax.experimental.pallas import tpu as pltpu

EMBED_DIM = 32
NUM_HEADS = 8
HEAD_DIM = EMBED_DIM // NUM_HEADS
RMS_EPS = float(jnp.finfo(jnp.float32).eps)   # nn.RMSNorm default eps
GLN_EPS = 1e-8
MAX_LEN = 10000

# Row layout of the packed vector-parameter / conv-mask slab (f32, width 2C).
ROW_RMS, ROW_BQ, ROW_BK, ROW_BV, ROW_BO = 0, 1, 2, 3, 4
ROW_B1, ROW_G1, ROW_BE1 = 5, 6, 7
ROW_B2, ROW_G2, ROW_BE2 = 8, 9, 10
ROW_B3, ROW_G3, ROW_BE3 = 11, 12, 13
ROW_A1, ROW_A2, ROW_A3 = 14, 15, 16
ROW_CM = 24                                   # conv (edge-mask * tap) rows start here


# ----------------------------- kernel helpers ------------------------------
def _prelu(x, a):
    return jnp.where(x > 0, x, a * x)


def _gln(x, gamma, beta):
    # Global layer norm over the whole (T, C) tile of one sample (single pass).
    inv_n = 1.0 / float(x.shape[0] * x.shape[1])
    mu = jnp.sum(x) * inv_n
    ex2 = jnp.sum(x * x) * inv_n
    var = jnp.maximum(ex2 - mu * mu, 0.0)
    return (x - mu) * jax.lax.rsqrt(var + GLN_EPS) * gamma + beta


# -------------------------- fused MHSA + FFN kernel -------------------------
def video_attention_kernel(x_ref, wqkvo_ref, wffn_ref, par_ref, ac_ref, o_ref):
    T, C = x_ref.shape                               # time-major tile, pos enc included
    C2 = 2 * C
    HT = NUM_HEADS * T
    f32, bf16 = jnp.float32, jnp.bfloat16

    def vrow(r, width=C2):                           # (1, width) parameter row
        return par_ref[r:r + 1, 0:width]

    x = x_ref[...]                                   # (T, C) f32
    residual = x

    # RMSNorm over channels
    ms = jnp.mean(x * x, axis=-1, keepdims=True)
    xn = (x * jax.lax.rsqrt(ms + RMS_EPS) * vrow(ROW_RMS, C)).astype(bf16)

    # Q/K/V projections (1/sqrt(head_dim) folded into Wq/bq offline), sublane-aligned
    # slices of one packed (4C, C) bf16 weight slab.
    q = jnp.dot(xn, wqkvo_ref[0:C, :], preferred_element_type=f32) + vrow(ROW_BQ, C)
    k = jnp.dot(xn, wqkvo_ref[C:2 * C, :], preferred_element_type=f32) + vrow(ROW_BK, C)
    v = jnp.dot(xn, wqkvo_ref[2 * C:3 * C, :], preferred_element_type=f32) + vrow(ROW_BV, C)

    # ---- multi-head attention with heads packed on the lane axis ----
    # rep   (T, HT):  rep[s', h*T+s]   = [s' == s]      (replication matrix)
    # mk    (C, HT):  mk[c, h*T+s]     = [c // hd == h] (per-head channel mask)
    # rep_t (HT, T), mv (HT, C): transposed counterparts.
    rep = ac_ref[0:T, :]
    mk = ac_ref[T:T + C, :]
    k_bd = (jnp.dot(k.T.astype(bf16), rep, preferred_element_type=f32) * mk).astype(bf16)
    s = jnp.dot(q.astype(bf16), k_bd, preferred_element_type=f32)     # (T, HT) scores
    p = jnp.exp(s - jnp.max(s, axis=-1, keepdims=True))               # global max: exact
    p_b = p.astype(bf16)

    rep_t = ac_ref[T + C:T + C + HT, 0:T]
    mv = ac_ref[T + C + HT:T + C + 2 * HT, 0:C]
    v_bd = (jnp.dot(rep_t, v.astype(bf16), preferred_element_type=f32) * mv).astype(bf16)
    o_un = jnp.dot(p_b, v_bd, preferred_element_type=f32)             # (T, C) unnormalized
    denom = jnp.dot(p_b, mv, preferred_element_type=f32)              # per-head softmax sums
    attn = o_un * pl.reciprocal(denom, approx=True)

    x = (jnp.dot(attn.astype(bf16), wqkvo_ref[3 * C:4 * C, :],
                 preferred_element_type=f32) + vrow(ROW_BO, C) + residual)

    # -------- conv-FFN --------
    residual = x
    a1, a2, a3 = vrow(ROW_A1), vrow(ROW_A2), vrow(ROW_A3, C)

    # conv1: 1x1 conv (C -> 2C) == matmul, PReLU, gLN
    y = jnp.dot(x.astype(bf16), wffn_ref[0:C, :], preferred_element_type=f32) + vrow(ROW_B1)
    y = _gln(_prelu(y, a1), vrow(ROW_G1), vrow(ROW_BE1))

    # conv2: depthwise conv, kernel=5, groups=2C, 'same' padding.
    # XLU rolls + precomputed (edge-mask x tap-weight) constant rows.
    acc = y * par_ref[ROW_CM + 4 * T:ROW_CM + 5 * T, :]                # center tap
    acc = acc + pltpu.roll(y, 2, 0) * par_ref[ROW_CM + 0 * T:ROW_CM + 1 * T, :]   # y[t-2]
    acc = acc + pltpu.roll(y, 1, 0) * par_ref[ROW_CM + 1 * T:ROW_CM + 2 * T, :]   # y[t-1]
    acc = acc + pltpu.roll(y, T - 1, 0) * par_ref[ROW_CM + 2 * T:ROW_CM + 3 * T, :]  # y[t+1]
    acc = acc + pltpu.roll(y, T - 2, 0) * par_ref[ROW_CM + 3 * T:ROW_CM + 4 * T, :]  # y[t+2]
    y = acc + vrow(ROW_B2)
    y = _gln(_prelu(y, a2), vrow(ROW_G2), vrow(ROW_BE2))

    # conv3: 1x1 conv (2C -> C)
    y = (jnp.dot(y.astype(bf16), wffn_ref[C:3 * C, 0:C],
                 preferred_element_type=f32) + vrow(ROW_B3, C))
    y = _gln(_prelu(y, a3), vrow(ROW_G3, C), vrow(ROW_BE3, C))

    o_ref[...] = y + residual                        # (T, C), time-major store


# ------------------------------- wrappers -----------------------------------
def positional_encoding(T, C):
    positions = jnp.arange(T, dtype=jnp.float32)[:, None]
    freq = jnp.exp(jnp.arange(0, C, 2, dtype=jnp.float32)
                   * (-math.log(MAX_LEN) / C))[None, :]
    args = positions * freq
    pe = jnp.zeros((T, C), jnp.float32)
    pe = pe.at[:, 0::2].set(jnp.sin(args))
    pe = pe.at[:, 1::2].set(jnp.cos(args))
    return pe


def pack_params(p, T):
    """Pack per-layer parameters into a few DMA-friendly slabs (done once)."""
    C = p["wq"].shape[0]
    C2 = 2 * C
    hd = HEAD_DIM
    HT = NUM_HEADS * T
    f32, bf16 = jnp.float32, jnp.bfloat16
    scale = 1.0 / math.sqrt(hd)

    # matmul weight slabs (bf16: native MXU operands, half the DMA bytes)
    w_qkvo = jnp.concatenate(
        [p["wq"] * scale, p["wk"], p["wv"], p["wo"]], axis=0).astype(bf16)     # (4C, C)
    w3_pad = jnp.zeros((C2, C2), f32).at[:, :C].set(p["w3"])
    w_ffn = jnp.concatenate([p["w1"], w3_pad], axis=0).astype(bf16)            # (3C, 2C)

    # vector-parameter + conv-mask slab (f32, width 2C)
    def r32(v):
        return jnp.zeros((1, C2), f32).at[0, :C].set(v)

    def r64(v):
        return v.reshape(1, C2).astype(f32)

    rows = [
        r32(p["rms_w"]), r32(p["bq"] * scale), r32(p["bk"]), r32(p["bv"]), r32(p["bo"]),
        r64(p["b1"]), r64(p["g1"]), r64(p["be1"]),
        r64(p["b2"]), r64(p["g2"]), r64(p["be2"]),
        r32(p["b3"]), r32(p["g3"]), r32(p["be3"]),
        jnp.full((1, C2), p["prelu"][0], f32),
        jnp.full((1, C2), p["prelu"][1], f32),
        jnp.full((1, C2), p["prelu"][2], f32),
        jnp.zeros((ROW_CM - 17, C2), f32),
    ]
    t = jnp.arange(T)

    def edge(off):                                   # validity of reading y[t + off]
        return ((t + off >= 0) & (t + off < T)).astype(f32)[:, None]

    taps = p["w2"]
    cm = [edge(-2) * taps[0][None, :], edge(-1) * taps[1][None, :],
          edge(+1) * taps[3][None, :], edge(+2) * taps[4][None, :],
          jnp.ones((T, 1), f32) * taps[2][None, :]]
    par = jnp.concatenate(rows + cm, axis=0)                                   # (ROW_CM+5T, 2C)
    assert par.shape == (ROW_CM + 5 * T, C2)

    # attention head-packing constants (bf16, exact 0/1)
    lane = jnp.arange(HT)
    rep = (jnp.arange(T)[:, None] == (lane % T)[None, :]).astype(bf16)         # (T, HT)
    mk = ((jnp.arange(C)[:, None] // hd) == (lane // T)[None, :]).astype(bf16)  # (C, HT)
    rep_t = jnp.zeros((HT, HT), bf16).at[:, :T].set(rep.T)
    mv = jnp.zeros((HT, HT), bf16).at[:, :C].set(mk.T)
    attn_const = jnp.concatenate([rep, mk, rep_t, mv], axis=0)                 # (T+C+2HT, HT)

    return dict(pos=positional_encoding(T, C), w_qkvo=w_qkvo, w_ffn=w_ffn,
                par=par, attn_const=attn_const)


def _const_spec(arr):
    shape = arr.shape
    zeros = (0,) * len(shape)
    return pl.BlockSpec(shape, lambda b, _z=zeros: _z)


@jax.jit
def video_attention_forward(x_nct, packed):
    B, C, T = x_nct.shape
    C2 = 2 * C
    HT = NUM_HEADS * T

    # Single fused XLA op: NCT -> NTC layout + positional-encoding add.
    x_ntc = jnp.transpose(x_nct, (0, 2, 1)) + packed["pos"][None]

    ntc_spec = pl.BlockSpec((None, T, C), lambda b: (b, 0, 0))

    flops_per_sample = (2 * T * C * (4 * C + 2 * C2)           # q/k/v/o + w1 + w3
                        + 2 * HT * (C * T + T * C + 2 * T * C))  # k_bd, v_bd, scores, o/denom
    cost = pl.CostEstimate(
        flops=B * flops_per_sample,
        transcendentals=B * (T * HT + 4 * T),
        bytes_accessed=(2 * x_ntc.size * 4 + packed["w_qkvo"].size * 2
                        + packed["w_ffn"].size * 2 + packed["par"].size * 4
                        + packed["attn_const"].size * 2))

    out_ntc = pl.pallas_call(
        video_attention_kernel,
        out_shape=jax.ShapeDtypeStruct((B, T, C), jnp.float32),
        grid=(B,),
        in_specs=[
            ntc_spec,                              # x (time-major, pos enc added)
            _const_spec(packed["w_qkvo"]),         # packed Wq/Wk/Wv/Wo (bf16)
            _const_spec(packed["w_ffn"]),          # packed W1/W3 (bf16)
            _const_spec(packed["par"]),            # biases/gains/PReLU/conv masks (f32)
            _const_spec(packed["attn_const"]),     # head-packing constants (bf16)
        ],
        out_specs=ntc_spec,
        compiler_params=pltpu.CompilerParams(
            dimension_semantics=("parallel",)),    # v7x: one sample per TensorCore
        cost_estimate=cost,
    )(x_ntc, packed["w_qkvo"], packed["w_ffn"], packed["par"], packed["attn_const"])

    return jnp.transpose(out_ntc, (0, 2, 1))       # back to the NCT contract


# ----------------------- deterministic parameter init -----------------------
def init_params(key, C):
    C2 = 2 * C
    ks = jax.random.split(key, 16)
    n = lambda k, s: (0.1 * jax.random.normal(k, s)).astype(jnp.float32)
    ones = lambda s: jnp.ones(s, jnp.float32)
    zeros = lambda s: jnp.zeros(s, jnp.float32)
    return dict(
        rms_w=ones((C,)),
        wq=n(ks[0], (C, C)), bq=n(ks[1], (C,)),
        wk=n(ks[2], (C, C)), bk=n(ks[3], (C,)),
        wv=n(ks[4], (C, C)), bv=n(ks[5], (C,)),
        wo=n(ks[6], (C, C)), bo=n(ks[7], (C,)),
        w1=n(ks[8], (C, C2)), b1=n(ks[9], (C2,)),
        g1=ones((C2,)), be1=zeros((C2,)),
        w2=n(ks[10], (5, C2)), b2=n(ks[11], (C2,)),
        g2=ones((C2,)), be2=zeros((C2,)),
        w3=n(ks[12], (C2, C)), b3=n(ks[13], (C,)),
        g3=ones((C,)), be3=zeros((C,)),
        prelu=jnp.full((3,), 0.25, jnp.float32),   # PReLU default init
    )


# ------------------------- plain-JAX reference ------------------------------
def _gln_ref(x, gamma, beta):
    mu = jnp.mean(x, axis=(1, 2), keepdims=True)
    var = jnp.mean((x - mu) ** 2, axis=(1, 2), keepdims=True)
    return (x - mu) * jax.lax.rsqrt(var + GLN_EPS) * gamma + beta


def reference_forward(x_nct, p, pos):
    # f32 reference using the same bf16-stored matmul weights (upcast) as the kernel.
    B, C, T = x_nct.shape
    bf = lambda name: p[name].astype(jnp.bfloat16).astype(jnp.float32)
    x = jnp.transpose(x_nct, (0, 2, 1)) + pos[None]
    residual = x
    ms = jnp.mean(x * x, axis=-1, keepdims=True)
    xn = x * jax.lax.rsqrt(ms + RMS_EPS) * p["rms_w"]
    q = xn @ bf("wq") + p["bq"]
    k = xn @ bf("wk") + p["bk"]
    v = xn @ bf("wv") + p["bv"]
    qh = q.reshape(B, T, NUM_HEADS, HEAD_DIM)
    kh = k.reshape(B, T, NUM_HEADS, HEAD_DIM)
    vh = v.reshape(B, T, NUM_HEADS, HEAD_DIM)
    s = jnp.einsum("bthd,bshd->bhts", qh, kh) / math.sqrt(HEAD_DIM)
    att = jax.nn.softmax(s, axis=-1)
    o = jnp.einsum("bhts,bshd->bthd", att, vh).reshape(B, T, C)
    x = o @ bf("wo") + p["bo"] + residual

    a1, a2, a3 = p["prelu"][0], p["prelu"][1], p["prelu"][2]
    res = x
    y = x @ bf("w1") + p["b1"]
    y = _gln_ref(jnp.where(y > 0, y, a1 * y), p["g1"], p["be1"])
    ypad = jnp.pad(y, ((0, 0), (2, 2), (0, 0)))
    acc = jnp.zeros_like(y)
    for kk in range(5):
        acc = acc + ypad[:, kk:kk + T, :] * p["w2"][kk][None, None, :]
    y = acc + p["b2"]
    y = _gln_ref(jnp.where(y > 0, y, a2 * y), p["g2"], p["be2"])
    y = y @ bf("w3") + p["b3"]
    y = _gln_ref(jnp.where(y > 0, y, a3 * y), p["g3"], p["be3"])
    y = y + res
    return jnp.transpose(y, (0, 2, 1))


# ---------------------------------- main -------------------------------------
if __name__ == "__main__":
    key = jax.random.PRNGKey(0)
    k_x, k_p = jax.random.split(key)
    B, C, T = 2, EMBED_DIM, 16
    x = jax.random.normal(k_x, (B, C, T), dtype=jnp.float32)   # NCT input
    params = init_params(k_p, C)
    packed = pack_params(params, T)                            # one-time packing

    out = video_attention_forward(x, packed)
    out = jax.block_until_ready(out)

    ref = reference_forward(x, params, packed["pos"])
    assert out.shape == (B, C, T)
    assert bool(jnp.all(jnp.isfinite(out)))
    # bf16 MXU activations + approx reciprocal: ~1e-3..1e-2 deviation vs f32 reference.
    assert bool(jnp.allclose(out, ref, rtol=2e-2, atol=2e-2)), "mismatch vs reference"

    print("KERNEL_OK")
</pallas_src>

<mosaic_0001>
module attributes {stable_mosaic.version = 11 : i64} {
  func.func @video_attention_kernel(%arg0: i32, %arg1: memref<1x16x32xf32, #tpu.memory_space<vmem>>, %arg2: memref<128x32xbf16, #tpu.memory_space<vmem>>, %arg3: memref<96x64xbf16, #tpu.memory_space<vmem>>, %arg4: memref<104x64xf32, #tpu.memory_space<vmem>>, %arg5: memref<304x128xbf16, #tpu.memory_space<vmem>>, %arg6: memref<1x16x32xf32, #tpu.memory_space<vmem>>) attributes {dimension_semantics = [#tpu.dimension_semantics<parallel>], iteration_bounds = array<i64: 2>, scalar_prefetch = 0 : i64, scratch_operands = 0 : i64, tpu.core_type = #tpu.core_type<tc>, window_params = [{transform_indices = @transform_0, window_bounds = array<i64: 1, 16, 32>}, {pipeline_mode = #tpu.pipeline_mode<synchronous>, transform_indices = @transform_1, window_bounds = array<i64: 128, 32>}, {pipeline_mode = #tpu.pipeline_mode<synchronous>, transform_indices = @transform_2, window_bounds = array<i64: 96, 64>}, {pipeline_mode = #tpu.pipeline_mode<synchronous>, transform_indices = @transform_3, window_bounds = array<i64: 104, 64>}, {pipeline_mode = #tpu.pipeline_mode<synchronous>, transform_indices = @transform_4, window_bounds = array<i64: 304, 128>}, {transform_indices = @transform_5, window_bounds = array<i64: 1, 16, 32>}]} {
    %c0 = arith.constant 0 : index
    %c0_0 = arith.constant 0 : index
    %c0_1 = arith.constant 0 : index
    %0 = vector.load %arg1[%c0, %c0_0, %c0_1] : memref<1x16x32xf32, #tpu.memory_space<vmem>>, vector<1x16x32xf32>
    %1 = vector.shape_cast %0 : vector<1x16x32xf32> to vector<16x32xf32>
    %2 = arith.mulf %1, %1 : vector<16x32xf32>
    %cst = arith.constant dense<0.000000e+00> : vector<16xf32>
    %3 = vector.multi_reduction <add>, %2, %cst [1] : vector<16x32xf32> to vector<16xf32>
    %4 = vector.shape_cast %3 : vector<16xf32> to vector<16x1xf32>
    %cst_2 = arith.constant 3.200000e+01 : f32
    %5 = vector.broadcast %cst_2 : f32 to vector<16x1xf32>
    %6 = arith.divf %4, %5 : vector<16x1xf32>
    %cst_3 = arith.constant 1.1920929E-7 : f32
    %7 = vector.broadcast %cst_3 : f32 to vector<16x1xf32>
    %8 = arith.addf %6, %7 : vector<16x1xf32>
    %9 = math.rsqrt %8 : vector<16x1xf32>
    %10 = vector.broadcast %9 : vector<16x1xf32> to vector<16x32xf32>
    %11 = arith.mulf %1, %10 : vector<16x32xf32>
    %c0_4 = arith.constant 0 : index
    %c0_5 = arith.constant 0 : index
    %12 = vector.load %arg4[%c0_4, %c0_5] : memref<104x64xf32, #tpu.memory_space<vmem>>, vector<1x32xf32>
    %13 = vector.broadcast %12 : vector<1x32xf32> to vector<16x32xf32>
    %14 = arith.mulf %11, %13 : vector<16x32xf32>
    %15 = arith.truncf %14 : vector<16x32xf32> to vector<16x32xbf16>
    %c0_6 = arith.constant 0 : index
    %c0_7 = arith.constant 0 : index
    %16 = vector.load %arg2[%c0_6, %c0_7] : memref<128x32xbf16, #tpu.memory_space<vmem>>, vector<32x32xbf16>
    %cst_8 = arith.constant dense<0.000000e+00> : vector<16x32xf32>
    %17 = tpu.matmul %15, %16, %cst_8 {dimension_numbers = #tpu.dot_dimension_numbers<[1], [0], [0], [1], [0, 0, 1, 1], [], []>} : vector<16x32xbf16>, vector<32x32xbf16>, vector<16x32xf32> -> vector<16x32xf32>
    %c1 = arith.constant 1 : index
    %c0_9 = arith.constant 0 : index
    %18 = vector.load %arg4[%c1, %c0_9] : memref<104x64xf32, #tpu.memory_space<vmem>>, vector<1x32xf32>
    %19 = vector.broadcast %18 : vector<1x32xf32> to vector<16x32xf32>
    %20 = arith.addf %17, %19 : vector<16x32xf32>
    %c32 = arith.constant 32 : index
    %c0_10 = arith.constant 0 : index
    %21 = vector.load %arg2[%c32, %c0_10] : memref<128x32xbf16, #tpu.memory_space<vmem>>, vector<32x32xbf16>
    %cst_11 = arith.constant dense<0.000000e+00> : vector<16x32xf32>
    %22 = tpu.matmul %15, %21, %cst_11 {dimension_numbers = #tpu.dot_dimension_numbers<[1], [0], [0], [1], [0, 0, 1, 1], [], []>} : vector<16x32xbf16>, vector<32x32xbf16>, vector<16x32xf32> -> vector<16x32xf32>
    %c2 = arith.constant 2 : index
    %c0_12 = arith.constant 0 : index
    %23 = vector.load %arg4[%c2, %c0_12] : memref<104x64xf32, #tpu.memory_space<vmem>>, vector<1x32xf32>
    %24 = vector.broadcast %23 : vector<1x32xf32> to vector<16x32xf32>
    %25 = arith.addf %22, %24 : vector<16x32xf32>
    %c64 = arith.constant 64 : index
    %c0_13 = arith.constant 0 : index
    %26 = vector.load %arg2[%c64, %c0_13] : memref<128x32xbf16, #tpu.memory_space<vmem>>, vector<32x32xbf16>
    %cst_14 = arith.constant dense<0.000000e+00> : vector<16x32xf32>
    %27 = tpu.matmul %15, %26, %cst_14 {dimension_numbers = #tpu.dot_dimension_numbers<[1], [0], [0], [1], [0, 0, 1, 1], [], []>} : vector<16x32xbf16>, vector<32x32xbf16>, vector<16x32xf32> -> vector<16x32xf32>
    %c3 = arith.constant 3 : index
    %c0_15 = arith.constant 0 : index
    %28 = vector.load %arg4[%c3, %c0_15] : memref<104x64xf32, #tpu.memory_space<vmem>>, vector<1x32xf32>
    %29 = vector.broadcast %28 : vector<1x32xf32> to vector<16x32xf32>
    %30 = arith.addf %27, %29 : vector<16x32xf32>
    %c0_16 = arith.constant 0 : index
    %c0_17 = arith.constant 0 : index
    %31 = vector.load %arg5[%c0_16, %c0_17] : memref<304x128xbf16, #tpu.memory_space<vmem>>, vector<16x128xbf16>
    %c16 = arith.constant 16 : index
    %c0_18 = arith.constant 0 : index
    %32 = vector.load %arg5[%c16, %c0_18] : memref<304x128xbf16, #tpu.memory_space<vmem>>, vector<32x128xbf16>
    %33 = tpu.transpose %25, [1, 0] : vector<16x32xf32> -> vector<32x16xf32>
    %34 = arith.truncf %33 : vector<32x16xf32> to vector<32x16xbf16>
    %cst_19 = arith.constant dense<0.000000e+00> : vector<32x128xf32>
    %35 = tpu.matmul %34, %31, %cst_19 {dimension_numbers = #tpu.dot_dimension_numbers<[1], [0], [0], [1], [0, 0, 1, 1], [], []>} : vector<32x16xbf16>, vector<16x128xbf16>, vector<32x128xf32> -> vector<32x128xf32>
    %36 = arith.extf %32 : vector<32x128xbf16> to vector<32x128xf32>
    %37 = arith.mulf %35, %36 : vector<32x128xf32>
    %38 = arith.truncf %37 : vector<32x128xf32> to vector<32x128xbf16>
    %39 = arith.truncf %20 : vector<16x32xf32> to vector<16x32xbf16>
    %cst_20 = arith.constant dense<0.000000e+00> : vector<16x128xf32>
    %40 = tpu.matmul %39, %38, %cst_20 {dimension_numbers = #tpu.dot_dimension_numbers<[1], [0], [0], [1], [0, 0, 1, 1], [], []>} : vector<16x32xbf16>, vector<32x128xbf16>, vector<16x128xf32> -> vector<16x128xf32>
    %cst_21 = arith.constant dense<0xFF800000> : vector<16xf32>
    %41 = vector.multi_reduction <maximumf>, %40, %cst_21 [1] : vector<16x128xf32> to vector<16xf32>
    %42 = vector.shape_cast %41 : vector<16xf32> to vector<16x1xf32>
    %43 = vector.broadcast %42 : vector<16x1xf32> to vector<16x128xf32>
    %44 = arith.subf %40, %43 : vector<16x128xf32>
    %45 = math.exp %44 : vector<16x128xf32>
    %46 = arith.truncf %45 : vector<16x128xf32> to vector<16x128xbf16>
    %c48 = arith.constant 48 : index
    %c0_22 = arith.constant 0 : index
    %47 = vector.load %arg5[%c48, %c0_22] : memref<304x128xbf16, #tpu.memory_space<vmem>>, vector<128x16xbf16>
    %c176 = arith.constant 176 : index
    %c0_23 = arith.constant 0 : index
    %48 = vector.load %arg5[%c176, %c0_23] : memref<304x128xbf16, #tpu.memory_space<vmem>>, vector<128x32xbf16>
    %49 = arith.truncf %30 : vector<16x32xf32> to vector<16x32xbf16>
    %cst_24 = arith.constant dense<0.000000e+00> : vector<128x32xf32>
    %50 = tpu.matmul %47, %49, %cst_24 {dimension_numbers = #tpu.dot_dimension_numbers<[1], [0], [0], [1], [0, 0, 1, 1], [], []>} : vector<128x16xbf16>, vector<16x32xbf16>, vector<128x32xf32> -> vector<128x32xf32>
    %51 = arith.extf %48 : vector<128x32xbf16> to vector<128x32xf32>
    %52 = arith.mulf %50, %51 : vector<128x32xf32>
    %53 = arith.truncf %52 : vector<128x32xf32> to vector<128x32xbf16>
    %cst_25 = arith.constant dense<0.000000e+00> : vector<16x32xf32>
    %54 = tpu.matmul %46, %53, %cst_25 {dimension_numbers = #tpu.dot_dimension_numbers<[1], [0], [0], [1], [0, 0, 1, 1], [], []>} : vector<16x128xbf16>, vector<128x32xbf16>, vector<16x32xf32> -> vector<16x32xf32>
    %cst_26 = arith.constant dense<0.000000e+00> : vector<16x32xf32>
    %55 = tpu.matmul %46, %48, %cst_26 {dimension_numbers = #tpu.dot_dimension_numbers<[1], [0], [0], [1], [0, 0, 1, 1], [], []>} : vector<16x128xbf16>, vector<128x32xbf16>, vector<16x32xf32> -> vector<16x32xf32>
    %56 = tpu.reciprocal %55 {approx = true} : vector<16x32xf32> -> vector<16x32xf32>
    %57 = arith.mulf %54, %56 : vector<16x32xf32>
    %58 = arith.truncf %57 : vector<16x32xf32> to vector<16x32xbf16>
    %c96 = arith.constant 96 : index
    %c0_27 = arith.constant 0 : index
    %59 = vector.load %arg2[%c96, %c0_27] : memref<128x32xbf16, #tpu.memory_space<vmem>>, vector<32x32xbf16>
    %cst_28 = arith.constant dense<0.000000e+00> : vector<16x32xf32>
    %60 = tpu.matmul %58, %59, %cst_28 {dimension_numbers = #tpu.dot_dimension_numbers<[1], [0], [0], [1], [0, 0, 1, 1], [], []>} : vector<16x32xbf16>, vector<32x32xbf16>, vector<16x32xf32> -> vector<16x32xf32>
    %c4 = arith.constant 4 : index
    %c0_29 = arith.constant 0 : index
    %61 = vector.load %arg4[%c4, %c0_29] : memref<104x64xf32, #tpu.memory_space<vmem>>, vector<1x32xf32>
    %62 = vector.broadcast %61 : vector<1x32xf32> to vector<16x32xf32>
    %63 = arith.addf %60, %62 : vector<16x32xf32>
    %64 = arith.addf %63, %1 : vector<16x32xf32>
    %c14 = arith.constant 14 : index
    %c0_30 = arith.constant 0 : index
    %65 = vector.load %arg4[%c14, %c0_30] : memref<104x64xf32, #tpu.memory_space<vmem>>, vector<1x64xf32>
    %c15 = arith.constant 15 : index
    %c0_31 = arith.constant 0 : index
    %66 = vector.load %arg4[%c15, %c0_31] : memref<104x64xf32, #tpu.memory_space<vmem>>, vector<1x64xf32>
    %c16_32 = arith.constant 16 : index
    %c0_33 = arith.constant 0 : index
    %67 = vector.load %arg4[%c16_32, %c0_33] : memref<104x64xf32, #tpu.memory_space<vmem>>, vector<1x32xf32>
    %68 = arith.truncf %64 : vector<16x32xf32> to vector<16x32xbf16>
    %c0_34 = arith.constant 0 : index
    %c0_35 = arith.constant 0 : index
    %69 = vector.load %arg3[%c0_34, %c0_35] : memref<96x64xbf16, #tpu.memory_space<vmem>>, vector<32x64xbf16>
    %cst_36 = arith.constant dense<0.000000e+00> : vector<16x64xf32>
    %70 = tpu.matmul %68, %69, %cst_36 {dimension_numbers = #tpu.dot_dimension_numbers<[1], [0], [0], [1], [0, 0, 1, 1], [], []>} : vector<16x32xbf16>, vector<32x64xbf16>, vector<16x64xf32> -> vector<16x64xf32>
    %c5 = arith.constant 5 : index
    %c0_37 = arith.constant 0 : index
    %71 = vector.load %arg4[%c5, %c0_37] : memref<104x64xf32, #tpu.memory_space<vmem>>, vector<1x64xf32>
    %72 = vector.broadcast %71 : vector<1x64xf32> to vector<16x64xf32>
    %73 = arith.addf %70, %72 : vector<16x64xf32>
    %cst_38 = arith.constant 0.000000e+00 : f32
    %74 = vector.broadcast %cst_38 : f32 to vector<16x64xf32>
    %75 = arith.cmpf ogt, %73, %74 : vector<16x64xf32>
    %76 = vector.broadcast %65 : vector<1x64xf32> to vector<16x64xf32>
    %77 = arith.mulf %76, %73 : vector<16x64xf32>
    %78 = arith.select %75, %73, %77 : vector<16x64xi1>, vector<16x64xf32>
    %c6 = arith.constant 6 : index
    %c0_39 = arith.constant 0 : index
    %79 = vector.load %arg4[%c6, %c0_39] : memref<104x64xf32, #tpu.memory_space<vmem>>, vector<1x64xf32>
    %c7 = arith.constant 7 : index
    %c0_40 = arith.constant 0 : index
    %80 = vector.load %arg4[%c7, %c0_40] : memref<104x64xf32, #tpu.memory_space<vmem>>, vector<1x64xf32>
    %81 = vector.shape_cast %78 : vector<16x64xf32> to vector<1x16x64xf32>
    %cst_41 = arith.constant dense<0.000000e+00> : vector<1xf32>
    %82 = vector.multi_reduction <add>, %81, %cst_41 [1, 2] : vector<1x16x64xf32> to vector<1xf32>
    %83 = vector.shape_cast %82 : vector<1xf32> to vector<1x1x1xf32>
    %84 = vector.extract %83[0, 0, 0] : f32 from vector<1x1x1xf32>
    %cst_42 = arith.constant 9.765625E-4 : f32
    %85 = arith.mulf %84, %cst_42 : f32
    %86 = arith.mulf %78, %78 : vector<16x64xf32>
    %87 = vector.shape_cast %86 : vector<16x64xf32> to vector<1x16x64xf32>
    %cst_43 = arith.constant dense<0.000000e+00> : vector<1xf32>
    %88 = vector.multi_reduction <add>, %87, %cst_43 [1, 2] : vector<1x16x64xf32> to vector<1xf32>
    %89 = vector.shape_cast %88 : vector<1xf32> to vector<1x1x1xf32>
    %90 = vector.extract %89[0, 0, 0] : f32 from vector<1x1x1xf32>
    %cst_44 = arith.constant 9.765625E-4 : f32
    %91 = arith.mulf %90, %cst_44 : f32
    %92 = arith.mulf %85, %85 : f32
    %93 = arith.subf %91, %92 : f32
    %cst_45 = arith.constant 0.000000e+00 : f32
    %94 = arith.maximumf %93, %cst_45 : f32
    %95 = vector.broadcast %85 : f32 to vector<16x64xf32>
    %96 = arith.subf %78, %95 : vector<16x64xf32>
    %cst_46 = arith.constant 9.99999993E-9 : f32
    %97 = arith.addf %94, %cst_46 : f32
    %98 = math.rsqrt %97 : f32
    %99 = vector.broadcast %98 : f32 to vector<16x64xf32>
    %100 = arith.mulf %96, %99 : vector<16x64xf32>
    %101 = vector.broadcast %79 : vector<1x64xf32> to vector<16x64xf32>
    %102 = arith.mulf %100, %101 : vector<16x64xf32>
    %103 = vector.broadcast %80 : vector<1x64xf32> to vector<16x64xf32>
    %104 = arith.addf %102, %103 : vector<16x64xf32>
    %c88 = arith.constant 88 : index
    %c0_47 = arith.constant 0 : index
    %105 = vector.load %arg4[%c88, %c0_47] : memref<104x64xf32, #tpu.memory_space<vmem>>, vector<16x64xf32>
    %106 = arith.mulf %104, %105 : vector<16x64xf32>
    %c2_i32 = arith.constant 2 : i32
    %107 = tpu.dynamic_rotate %104 by %c2_i32 dim 0 : vector<16x64xf32>, i32 -> vector<16x64xf32>
    %c24 = arith.constant 24 : index
    %c0_48 = arith.constant 0 : index
    %108 = vector.load %arg4[%c24, %c0_48] : memref<104x64xf32, #tpu.memory_space<vmem>>, vector<16x64xf32>
    %109 = arith.mulf %107, %108 : vector<16x64xf32>
    %110 = arith.addf %106, %109 : vector<16x64xf32>
    %c1_i32 = arith.constant 1 : i32
    %111 = tpu.dynamic_rotate %104 by %c1_i32 dim 0 : vector<16x64xf32>, i32 -> vector<16x64xf32>
    %c40 = arith.constant 40 : index
    %c0_49 = arith.constant 0 : index
    %112 = vector.load %arg4[%c40, %c0_49] : memref<104x64xf32, #tpu.memory_space<vmem>>, vector<16x64xf32>
    %113 = arith.mulf %111, %112 : vector<16x64xf32>
    %114 = arith.addf %110, %113 : vector<16x64xf32>
    %c15_i32 = arith.constant 15 : i32
    %115 = tpu.dynamic_rotate %104 by %c15_i32 dim 0 : vector<16x64xf32>, i32 -> vector<16x64xf32>
    %c56 = arith.constant 56 : index
    %c0_50 = arith.constant 0 : index
    %116 = vector.load %arg4[%c56, %c0_50] : memref<104x64xf32, #tpu.memory_space<vmem>>, vector<16x64xf32>
    %117 = arith.mulf %115, %116 : vector<16x64xf32>
    %118 = arith.addf %114, %117 : vector<16x64xf32>
    %c14_i32 = arith.constant 14 : i32
    %119 = tpu.dynamic_rotate %104 by %c14_i32 dim 0 : vector<16x64xf32>, i32 -> vector<16x64xf32>
    %c72 = arith.constant 72 : index
    %c0_51 = arith.constant 0 : index
    %120 = vector.load %arg4[%c72, %c0_51] : memref<104x64xf32, #tpu.memory_space<vmem>>, vector<16x64xf32>
    %121 = arith.mulf %119, %120 : vector<16x64xf32>
    %122 = arith.addf %118, %121 : vector<16x64xf32>
    %c8 = arith.constant 8 : index
    %c0_52 = arith.constant 0 : index
    %123 = vector.load %arg4[%c8, %c0_52] : memref<104x64xf32, #tpu.memory_space<vmem>>, vector<1x64xf32>
    %124 = vector.broadcast %123 : vector<1x64xf32> to vector<16x64xf32>
    %125 = arith.addf %122, %124 : vector<16x64xf32>
    %cst_53 = arith.constant 0.000000e+00 : f32
    %126 = vector.broadcast %cst_53 : f32 to vector<16x64xf32>
    %127 = arith.cmpf ogt, %125, %126 : vector<16x64xf32>
    %128 = vector.broadcast %66 : vector<1x64xf32> to vector<16x64xf32>
    %129 = arith.mulf %128, %125 : vector<16x64xf32>
    %130 = arith.select %127, %125, %129 : vector<16x64xi1>, vector<16x64xf32>
    %c9 = arith.constant 9 : index
    %c0_54 = arith.constant 0 : index
    %131 = vector.load %arg4[%c9, %c0_54] : memref<104x64xf32, #tpu.memory_space<vmem>>, vector<1x64xf32>
    %c10 = arith.constant 10 : index
    %c0_55 = arith.constant 0 : index
    %132 = vector.load %arg4[%c10, %c0_55] : memref<104x64xf32, #tpu.memory_space<vmem>>, vector<1x64xf32>
    %133 = vector.shape_cast %130 : vector<16x64xf32> to vector<1x16x64xf32>
    %cst_56 = arith.constant dense<0.000000e+00> : vector<1xf32>
    %134 = vector.multi_reduction <add>, %133, %cst_56 [1, 2] : vector<1x16x64xf32> to vector<1xf32>
    %135 = vector.shape_cast %134 : vector<1xf32> to vector<1x1x1xf32>
    %136 = vector.extract %135[0, 0, 0] : f32 from vector<1x1x1xf32>
    %cst_57 = arith.constant 9.765625E-4 : f32
    %137 = arith.mulf %136, %cst_57 : f32
    %138 = arith.mulf %130, %130 : vector<16x64xf32>
    %139 = vector.shape_cast %138 : vector<16x64xf32> to vector<1x16x64xf32>
    %cst_58 = arith.constant dense<0.000000e+00> : vector<1xf32>
    %140 = vector.multi_reduction <add>, %139, %cst_58 [1, 2] : vector<1x16x64xf32> to vector<1xf32>
    %141 = vector.shape_cast %140 : vector<1xf32> to vector<1x1x1xf32>
    %142 = vector.extract %141[0, 0, 0] : f32 from vector<1x1x1xf32>
    %cst_59 = arith.constant 9.765625E-4 : f32
    %143 = arith.mulf %142, %cst_59 : f32
    %144 = arith.mulf %137, %137 : f32
    %145 = arith.subf %143, %144 : f32
    %cst_60 = arith.constant 0.000000e+00 : f32
    %146 = arith.maximumf %145, %cst_60 : f32
    %147 = vector.broadcast %137 : f32 to vector<16x64xf32>
    %148 = arith.subf %130, %147 : vector<16x64xf32>
    %cst_61 = arith.constant 9.99999993E-9 : f32
    %149 = arith.addf %146, %cst_61 : f32
    %150 = math.rsqrt %149 : f32
    %151 = vector.broadcast %150 : f32 to vector<16x64xf32>
    %152 = arith.mulf %148, %151 : vector<16x64xf32>
    %153 = vector.broadcast %131 : vector<1x64xf32> to vector<16x64xf32>
    %154 = arith.mulf %152, %153 : vector<16x64xf32>
    %155 = vector.broadcast %132 : vector<1x64xf32> to vector<16x64xf32>
    %156 = arith.addf %154, %155 : vector<16x64xf32>
    %157 = arith.truncf %156 : vector<16x64xf32> to vector<16x64xbf16>
    %c32_62 = arith.constant 32 : index
    %c0_63 = arith.constant 0 : index
    %158 = vector.load %arg3[%c32_62, %c0_63] : memref<96x64xbf16, #tpu.memory_space<vmem>>, vector<64x32xbf16>
    %cst_64 = arith.constant dense<0.000000e+00> : vector<16x32xf32>
    %159 = tpu.matmul %157, %158, %cst_64 {dimension_numbers = #tpu.dot_dimension_numbers<[1], [0], [0], [1], [0, 0, 1, 1], [], []>} : vector<16x64xbf16>, vector<64x32xbf16>, vector<16x32xf32> -> vector<16x32xf32>
    %c11 = arith.constant 11 : index
    %c0_65 = arith.constant 0 : index
    %160 = vector.load %arg4[%c11, %c0_65] : memref<104x64xf32, #tpu.memory_space<vmem>>, vector<1x32xf32>
    %161 = vector.broadcast %160 : vector<1x32xf32> to vector<16x32xf32>
    %162 = arith.addf %159, %161 : vector<16x32xf32>
    %cst_66 = arith.constant 0.000000e+00 : f32
    %163 = vector.broadcast %cst_66 : f32 to vector<16x32xf32>
    %164 = arith.cmpf ogt, %162, %163 : vector<16x32xf32>
    %165 = vector.broadcast %67 : vector<1x32xf32> to vector<16x32xf32>
    %166 = arith.mulf %165, %162 : vector<16x32xf32>
    %167 = arith.select %164, %162, %166 : vector<16x32xi1>, vector<16x32xf32>
    %c12 = arith.constant 12 : index
    %c0_67 = arith.constant 0 : index
    %168 = vector.load %arg4[%c12, %c0_67] : memref<104x64xf32, #tpu.memory_space<vmem>>, vector<1x32xf32>
    %c13 = arith.constant 13 : index
    %c0_68 = arith.constant 0 : index
    %169 = vector.load %arg4[%c13, %c0_68] : memref<104x64xf32, #tpu.memory_space<vmem>>, vector<1x32xf32>
    %170 = vector.shape_cast %167 : vector<16x32xf32> to vector<1x16x32xf32>
    %cst_69 = arith.constant dense<0.000000e+00> : vector<1xf32>
    %171 = vector.multi_reduction <add>, %170, %cst_69 [1, 2] : vector<1x16x32xf32> to vector<1xf32>
    %172 = vector.shape_cast %171 : vector<1xf32> to vector<1x1x1xf32>
    %173 = vector.extract %172[0, 0, 0] : f32 from vector<1x1x1xf32>
    %cst_70 = arith.constant 0.001953125 : f32
    %174 = arith.mulf %173, %cst_70 : f32
    %175 = arith.mulf %167, %167 : vector<16x32xf32>
    %176 = vector.shape_cast %175 : vector<16x32xf32> to vector<1x16x32xf32>
    %cst_71 = arith.constant dense<0.000000e+00> : vector<1xf32>
    %177 = vector.multi_reduction <add>, %176, %cst_71 [1, 2] : vector<1x16x32xf32> to vector<1xf32>
    %178 = vector.shape_cast %177 : vector<1xf32> to vector<1x1x1xf32>
    %179 = vector.extract %178[0, 0, 0] : f32 from vector<1x1x1xf32>
    %cst_72 = arith.constant 0.001953125 : f32
    %180 = arith.mulf %179, %cst_72 : f32
    %181 = arith.mulf %174, %174 : f32
    %182 = arith.subf %180, %181 : f32
    %cst_73 = arith.constant 0.000000e+00 : f32
    %183 = arith.maximumf %182, %cst_73 : f32
    %184 = vector.broadcast %174 : f32 to vector<16x32xf32>
    %185 = arith.subf %167, %184 : vector<16x32xf32>
    %cst_74 = arith.constant 9.99999993E-9 : f32
    %186 = arith.addf %183, %cst_74 : f32
    %187 = math.rsqrt %186 : f32
    %188 = vector.broadcast %187 : f32 to vector<16x32xf32>
    %189 = arith.mulf %185, %188 : vector<16x32xf32>
    %190 = vector.broadcast %168 : vector<1x32xf32> to vector<16x32xf32>
    %191 = arith.mulf %189, %190 : vector<16x32xf32>
    %192 = vector.broadcast %169 : vector<1x32xf32> to vector<16x32xf32>
    %193 = arith.addf %191, %192 : vector<16x32xf32>
    %194 = arith.addf %193, %64 : vector<16x32xf32>
    %c0_75 = arith.constant 0 : index
    %c0_76 = arith.constant 0 : index
    %c0_77 = arith.constant 0 : index
    %195 = vector.load %arg6[%c0_75, %c0_76, %c0_77] : memref<1x16x32xf32, #tpu.memory_space<vmem>>, vector<1x16x32xf32>
    %196 = vector.shape_cast %195 : vector<1x16x32xf32> to vector<16x32xf32>
    %197 = vector.shape_cast %194 : vector<16x32xf32> to vector<1x16x32xf32>
    tpu.vector_store %arg6[%c0_75, %c0_76, %c0_77], %197 {strides = array<i32>} : memref<1x16x32xf32, #tpu.memory_space<vmem>>, vector<1x16x32xf32>,
    return
  }
  func.func @transform_0(%arg0: i32) -> (i32, i32, i32) {
    %c0_i32 = arith.constant 0 : i32
    %c0_i32_0 = arith.constant 0 : i32
    %c0_i32_1 = arith.constant 0 : i32
    return %arg0, %c0_i32, %c0_i32_0 : i32, i32, i32
  }
  func.func @transform_1(%arg0: i32) -> (i32, i32) {
    %c0_i32 = arith.constant 0 : i32
    %c0_i32_0 = arith.constant 0 : i32
    %c0_i32_1 = arith.constant 0 : i32
    return %c0_i32, %c0_i32_0 : i32, i32
  }
  func.func @transform_2(%arg0: i32) -> (i32, i32) {
    %c0_i32 = arith.constant 0 : i32
    %c0_i32_0 = arith.constant 0 : i32
    %c0_i32_1 = arith.constant 0 : i32
    return %c0_i32, %c0_i32_0 : i32, i32
  }
  func.func @transform_3(%arg0: i32) -> (i32, i32) {
    %c0_i32 = arith.constant 0 : i32
    %c0_i32_0 = arith.constant 0 : i32
    %c0_i32_1 = arith.constant 0 : i32
    return %c0_i32, %c0_i32_0 : i32, i32
  }
  func.func @transform_4(%arg0: i32) -> (i32, i32) {
    %c0_i32 = arith.constant 0 : i32
    %c0_i32_0 = arith.constant 0 : i32
    %c0_i32_1 = arith.constant 0 : i32
    return %c0_i32, %c0_i32_0 : i32, i32
  }
  func.func @transform_5(%arg0: i32) -> (i32, i32, i32) {
    %c0_i32 = arith.constant 0 : i32
    %c0_i32_0 = arith.constant 0 : i32
    %c0_i32_1 = arith.constant 0 : i32
    return %arg0, %c0_i32, %c0_i32_0 : i32, i32, i32
  }
}

</mosaic_0001>

<llo_original>
// kernel: video_attention_forward.1
$region0: #{video_attention_forward.1}
  #allocation0 [shape = 'u32[]', space=smem, size = 0x4, offset = 0x4, fixed_abs, tag = 'smem constant byte address 0x4 - core index']
  #allocation1 [shape = 'u32[144,128]{1,0:T(1,128)}', space=vmem, size = 0x12000, scoped, tag = 'internal scratch']
  %s0 = inlined_call_operand.vmem [shape: f32[2,16,32], index: 0, kind: input, shape index: {}]
  %s1 = inlined_call_operand.vmem [shape: bf16[128,32], index: 1, kind: input, shape index: {}]
  %s2 = inlined_call_operand.vmem [shape: bf16[96,64], index: 2, kind: input, shape index: {}]
  %s3 = inlined_call_operand.vmem [shape: f32[104,64], index: 3, kind: input, shape index: {}]
  %s4 = inlined_call_operand.vmem [shape: bf16[304,128], index: 4, kind: input, shape index: {}]
  %s5 = inlined_call_operand.hbm [shape: f32[2,16,32], index: 5, kind: output, shape index: {}]
  %s6 = sld [smem:[#allocation0]]
  $region53: #{video_attention_forward.1} parent=0
    _
  %s8 = ssub.s32 1, %s6
  %s9 = scalar_select 0, %s8, %s6
  $region1: #{video_attention_forward.1} parent=0
    #allocation2 [shape = 'u8[16384]{0}', space=vmem, size = 0x4000, scoped, tag = 'output window, operand 0']
    #allocation3 [shape = 's32[2]{0}', space=sflag, size = 0x8, scoped, tag = 'scoped memory for video_attention_forward.1']
    %10 = vsyncpa [#allocation3], 0
    %s11 = scalar_lea.sflag [#allocation3], 1
    %12 = vsyncpa %s11, 0
    loop: start=0, step=1, limit=4
    $region2: #{video_attention_forward.1} parent=1 // loop_pre_header
      _
    $region3: #{video_attention_forward.1} parent=1 // loop_header
      %s14 = sphi 0, %s18
      %p15 = scmp.ge.s32.totalorder %s14, 4
      %s24 = sphi 0, %s26
      %s27 = sphi 0, %s24
      %s28 = sphi 0, %s27
      %s44 = sphi 0, %s28
      %s48 = sphi 0, %s48
      %s50 = sphi 0, %s48
      %s51 = sphi 0, %s50
      %s65 = sphi 0, %s51
      %s69 = sphi 0, %s69
      %s71 = sphi 0, %s69
      %s72 = sphi 0, %s71
      %s86 = sphi 0, %s72
      %s90 = sphi 0, %s90
      %s92 = sphi 0, %s90
      %s93 = sphi 0, %s92
      %s107 = sphi 0, %s93
      %s111 = sphi 0, %s111
      %s113 = sphi 0, %s111
      %s114 = sphi 0, %s113
      %s128 = sphi 0, %s114
      %s134 = sphi 0, %s136
      %s137 = sphi 0, %s134
      %s138 = sphi 0, %s137
      %s154 = sphi 0, %s138
    $region4: #{video_attention_forward.1} parent=1 // loop_header_branch
      %17 = sbr.rel (%p15) target = $region8
    $region5: #{video_attention_forward.1} parent=1 // loop_body
      %s19 = ssub.s32 %s14, 1
      %s20 = ssub.s32 %s14, 2
      %s21 = sadd.s32 %s14, 1
      %s22 = ssub.s32 %s14, %s21
      %p23 = scmp.eq.s32.totalorder %s22, 0
      %s25 = sadd.s32 %s24, 1
      %s26 = scalar_select %p23, %s24, %s25
      %p29 = pneg %p23
      %p30 = scmp.eq.s32.totalorder %s14, 1
      %p31 = por %p29, %p30
      %p32 = scmp.ne.s32.totalorder %s24, %s27
      %p33 = scmp.eq.s32.totalorder %s14, 0
      %p34 = por %p32, %p33
      %p35 = scmp.ne.s32.totalorder %s24, %s27
      %p36 = scmp.eq.s32.totalorder %s19, 1
      %p37 = por %p35, %p36
      %p38 = scmp.ne.s32.totalorder %s27, %s28
      %p39 = scmp.eq.s32.totalorder %s19, 0
      %p40 = por %p38, %p39
      %p41 = scmp.ne.s32.totalorder %s27, %s28
      %p42 = scmp.eq.s32.totalorder %s20, 1
      %p43 = por %p41, %p42
      %p45 = scmp.ne.s32.totalorder %s28, %s44
      %p46 = scmp.eq.s32.totalorder %s20, 0
      %p47 = por %p45, %p46
      %s49 = sadd.s32 %s48, 1
      %p52 = scmp.eq.s32.totalorder %s14, 1
      %p53 = scmp.ne.s32.totalorder %s48, %s50
      %p54 = scmp.eq.s32.totalorder %s14, 0
      %p55 = por %p53, %p54
      %p56 = scmp.ne.s32.totalorder %s48, %s50
      %p57 = scmp.eq.s32.totalorder %s19, 1
      %p58 = por %p56, %p57
      %p59 = scmp.ne.s32.totalorder %s50, %s51
      %p60 = scmp.eq.s32.totalorder %s19, 0
      %p61 = por %p59, %p60
      %p62 = scmp.ne.s32.totalorder %s50, %s51
      %p63 = scmp.eq.s32.totalorder %s20, 1
      %p64 = por %p62, %p63
      %p66 = scmp.ne.s32.totalorder %s51, %s65
      %p67 = scmp.eq.s32.totalorder %s20, 0
      %p68 = por %p66, %p67
      %s70 = sadd.s32 %s69, 1
      %p73 = scmp.eq.s32.totalorder %s14, 1
      %p74 = scmp.ne.s32.totalorder %s69, %s71
      %p75 = scmp.eq.s32.totalorder %s14, 0
      %p76 = por %p74, %p75
      %p77 = scmp.ne.s32.totalorder %s69, %s71
      %p78 = scmp.eq.s32.totalorder %s19, 1
      %p79 = por %p77, %p78
      %p80 = scmp.ne.s32.totalorder %s71, %s72
      %p81 = scmp.eq.s32.totalorder %s19, 0
      %p82 = por %p80, %p81
      %p83 = scmp.ne.s32.totalorder %s71, %s72
      %p84 = scmp.eq.s32.totalorder %s20, 1
      %p85 = por %p83, %p84
      %p87 = scmp.ne.s32.totalorder %s72, %s86
      %p88 = scmp.eq.s32.totalorder %s20, 0
      %p89 = por %p87, %p88
      %s91 = sadd.s32 %s90, 1
      %p94 = scmp.eq.s32.totalorder %s14, 1
      %p95 = scmp.ne.s32.totalorder %s90, %s92
      %p96 = scmp.eq.s32.totalorder %s14, 0
      %p97 = por %p95, %p96
      %p98 = scmp.ne.s32.totalorder %s90, %s92
      %p99 = scmp.eq.s32.totalorder %s19, 1
      %p100 = por %p98, %p99
      %p101 = scmp.ne.s32.totalorder %s92, %s93
      %p102 = scmp.eq.s32.totalorder %s19, 0
      %p103 = por %p101, %p102
      %p104 = scmp.ne.s32.totalorder %s92, %s93
      %p105 = scmp.eq.s32.totalorder %s20, 1
      %p106 = por %p104, %p105
      %p108 = scmp.ne.s32.totalorder %s93, %s107
      %p109 = scmp.eq.s32.totalorder %s20, 0
      %p110 = por %p108, %p109
      %s112 = sadd.s32 %s111, 1
      %p115 = scmp.eq.s32.totalorder %s14, 1
      %p116 = scmp.ne.s32.totalorder %s111, %s113
      %p117 = scmp.eq.s32.totalorder %s14, 0
      %p118 = por %p116, %p117
      %p119 = scmp.ne.s32.totalorder %s111, %s113
      %p120 = scmp.eq.s32.totalorder %s19, 1
      %p121 = por %p119, %p120
      %p122 = scmp.ne.s32.totalorder %s113, %s114
      %p123 = scmp.eq.s32.totalorder %s19, 0
      %p124 = por %p122, %p123
      %p125 = scmp.ne.s32.totalorder %s113, %s114
      %p126 = scmp.eq.s32.totalorder %s20, 1
      %p127 = por %p125, %p126
      %p129 = scmp.ne.s32.totalorder %s114, %s128
      %p130 = scmp.eq.s32.totalorder %s20, 0
      %p131 = por %p129, %p130
      %s132 = ssub.s32 %s14, %s21
      %p133 = scmp.eq.s32.totalorder %s132, 0
      %s135 = sadd.s32 %s134, 1
      %s136 = scalar_select %p133, %s134, %s135
      %p139 = pneg %p133
      %p140 = scmp.eq.s32.totalorder %s14, 1
      %p141 = por %p139, %p140
      %p142 = scmp.ne.s32.totalorder %s134, %s137
      %p143 = scmp.eq.s32.totalorder %s14, 0
      %p144 = por %p142, %p143
      %p145 = scmp.ne.s32.totalorder %s134, %s137
      %p146 = scmp.eq.s32.totalorder %s19, 1
      %p147 = por %p145, %p146
      %p148 = scmp.ne.s32.totalorder %s137, %s138
      %p149 = scmp.eq.s32.totalorder %s19, 0
      %p150 = por %p148, %p149
      %p151 = scmp.ne.s32.totalorder %s137, %s138
      %p152 = scmp.eq.s32.totalorder %s20, 1
      %p153 = por %p151, %p152
      %p155 = scmp.ne.s32.totalorder %s138, %s154
      %p156 = scmp.eq.s32.totalorder %s20, 0
      %p157 = por %p155, %p156
      %p158 = scmp.le.s32.totalorder 1, %s14
      %p159 = scmp.lt.s32.totalorder %s14, 3
      %p160 = pnand %p158, %p159
      %p161 = pneg %p160
      // Predicated region
      $region9: #{video_attention_forward.1} parent=5 // pred_check
        _
      $region10: #{video_attention_forward.1} parent=5 // pred_check_branch
        %163 = sbr.rel (%p160) target = $region12
      $region11: #{video_attention_forward.1} parent=5 // pred_region
        %s164 = ssub.s32 %s14, 1
        // Predicated region
        $region13: #{video_attention_forward.1} parent=11 // pred_check
          %p165 = pneg %p61
        $region14: #{video_attention_forward.1} parent=11 // pred_check_branch
          %167 = sbr.rel (%p165) target = $region16
        $region15: #{video_attention_forward.1} parent=11 // pred_region
          _
        $region16: #{video_attention_forward.1} parent=11 // pred_fallthru
          _
        // Predicated region
        $region17: #{video_attention_forward.1} parent=11 // pred_check
          %p168 = pneg %p82
        $region18: #{video_attention_forward.1} parent=11 // pred_check_branch
          %170 = sbr.rel (%p168) target = $region20
        $region19: #{video_attention_forward.1} parent=11 // pred_region
          _
        $region20: #{video_attention_forward.1} parent=11 // pred_fallthru
          _
        // Predicated region
        $region21: #{video_attention_forward.1} parent=11 // pred_check
          %p171 = pneg %p103
        $region22: #{video_attention_forward.1} parent=11 // pred_check_branch
          %173 = sbr.rel (%p171) target = $region24
        $region23: #{video_attention_forward.1} parent=11 // pred_region
          _
        $region24: #{video_attention_forward.1} parent=11 // pred_fallthru
          _
        // Predicated region
        $region25: #{video_attention_forward.1} parent=11 // pred_check
          %p174 = pneg %p124
        $region26: #{video_attention_forward.1} parent=11 // pred_check_branch
          %176 = sbr.rel (%p174) target = $region28
        $region27: #{video_attention_forward.1} parent=11 // pred_region
          _
        $region28: #{video_attention_forward.1} parent=11 // pred_fallthru
          _
      $region12: #{video_attention_forward.1} parent=5 // pred_fallthru
        _
      %p177 = scmp.lt.s32.totalorder %s14, 2
      // Predicated region
      $region29: #{video_attention_forward.1} parent=5 // pred_check
        %p178 = pneg %p177
      $region30: #{video_attention_forward.1} parent=5 // pred_check_branch
        %180 = sbr.rel (%p178) target = $region32
      $region31: #{video_attention_forward.1} parent=5 // pred_region
        // Predicated region
        $region33: #{video_attention_forward.1} parent=31 // pred_check
          %p181 = pneg %p34
        $region34: #{video_attention_forward.1} parent=31 // pred_check_branch
          %183 = sbr.rel (%p181) target = $region36
        $region35: #{video_attention_forward.1} parent=31 // pred_region
          %p184 = scmp.lt.s32.totalorder %s14, 1
          %s185 = scalar_select %p184, %s14, 1
          %s186 = smul.addr %s185, 2
          %s187 = smul.addr %s186, 8
          %s188 = scalar_lea.vmem %s0, %s187
        $region36: #{video_attention_forward.1} parent=31 // pred_fallthru
          _
      $region32: #{video_attention_forward.1} parent=5 // pred_fallthru
        _
      %p189 = scmp.le.s32.totalorder 1, %s14
      %p190 = scmp.lt.s32.totalorder %s14, 3
      %p191 = pnand %p189, %p190
      %p192 = pneg %p191
      // Predicated region
      $region37: #{video_attention_forward.1} parent=5 // pred_check
        _
      $region38: #{video_attention_forward.1} parent=5 // pred_check_branch
        %194 = sbr.rel (%p191) target = $region40
      $region39: #{video_attention_forward.1} parent=5 // pred_region
        %s195 = ssub.s32 %s14, 1
        %p196 = scmp.lt.s32.totalorder %s19, 1
        %s197 = scalar_select %p196, %s19, 1
        %s198 = smul.addr %s197, 2
        %s199 = smul.addr %s198, 8
        %s200 = scalar_lea.vmem %s0, %s199
        %p201 = pneg %p40
        %p202 = pneg %p37
        %p203 = pneg %p61
        %p204 = pneg %p58
        %p205 = pneg %p82
        %p206 = pneg %p79
        %p207 = pneg %p103
        %p208 = pneg %p100
        %p209 = pneg %p124
        %p210 = pneg %p121
        %p211 = pneg %p150
        %p212 = pneg %p147
        %s213 = sand.u32 %s137, 1
        %s214 = scalar_lea.sflag [#allocation3], %s213
        %s215 = sand.u32 %s137, 1
        %s216 = smul.addr %s215, 16
        %s217 = scalar_lea.vmem [#allocation2], %s216
        %p218 = scmp.lt.s32.totalorder %s19, 1
        %s219 = scalar_select %p218, %s19, 1
        %s220 = smul.addr %s219, 2
        %s221 = smul.addr %s220, 8
        %s222 = scalar_lea.vmem %s0, %s221
        %v224 = vld [vmem:[%s222] sm:$0xff]
        %v225 = vld [vmem:[%s222 + $0x8] sm:$0xff]
        %v226 = vmul.f32 %v224, %v224
        %v227 = vmul.f32 %v225, %v225
        %vm228 = vcmask 261120
        %v229 = vsel %vm228, %v226, 0.0
        %230 = vadd.xlane.f32.xlu0 %v229
        %v231 = vpop.xlane.xlu0 %230
        %v232 = vsel %vm228, %v227, 0.0
        %233 = vadd.xlane.f32.xlu0 %v232
        %v234 = vpop.xlane.xlu0 %233
        %v235 = vrcp.pop 32.0
        %v236 = vmul.f32 %v231, %v235
        %v237 = vmul.f32 %v234, %v235
        %v238 = vadd.f32 %v236, 1.1920929e-07
        %v239 = vadd.f32 %v237, 1.1920929e-07
        %v240 = vrsqrt.pop %v238
        %v241 = vrsqrt.pop %v239
        %v242 = vmul.f32 %v224, %v240
        %v243 = vmul.f32 %v225, %v241
        %v244 = vld [vmem:[%s3] sm:$0x1]
        %v245 = vlaneseq
        %v246 = vshrl.u32 %v245, 7
        %v247 = vsub.s32 0, %v246
        %v248 = vrot.slane %v244, %v247
        %v249 = vmul.f32 %v242, %v248
        %v250 = vmul.f32 %v243, %v248
        %v251 = vpack.c.bf16 %v250, %v249
        %v252 = vld [vmem:[%s1] sm:$0xf]
        %v253 = vld [vmem:[%s1 + $0x4] sm:$0xf]
        %v254 = vld [vmem:[%s1 + $0x8] sm:$0xf]
        %v255 = vld [vmem:[%s1 + $0xc] sm:$0xf]
        %v256 = vld [vmem:[%s3 + $0x1] sm:$0x1]
        %v257 = vlaneseq
        %v258 = vshrl.u32 %v257, 7
        %v259 = vsub.s32 0, %v258
        %v260 = vrot.slane %v256, %v259
        %v265 = vunpack.c.l.b16 %v252
        %v266 = vunpack.c.l.b16 %v253
        %v267 = vunpack.c.l.b16 %v254
        %v268 = vunpack.c.l.b16 %v255
        %v269 = vpack.c.b16 %v266, %v265
        %v270 = vpack.c.b16 %v268, %v267
        %v274 = vsel %vm228, %v251, 0
        %276 = vmatprep.subr.bf16.mxu0 0
        %277 = vmatpush1.bf16.msra.mxu0 %v269
        %278 = vmatprep.subr.bf16.mxu0 0
        %279 = vmatpush1.bf16.msra.mxu0 %v270
        %280 = vmatprep.subr.bf16.mxu0 0
        %281 = vmatpush1.bf16.msra.mxu0 0
        %282 = vmatprep.subr.bf16.mxu0 0
        %283 = vmatpush1.bf16.msra.mxu0 0
        %284 = vmatprep.subr.bf16.mxu0 0
        %285 = vmatpush1.bf16.msra.mxu0 0
        %286 = vmatprep.subr.bf16.mxu0 0
        %287 = vmatpush1.bf16.msra.mxu0 0
        %288 = vmatprep.subr.bf16.mxu0 0
        %289 = vmatpush1.bf16.msra.mxu0 0
        %290 = vmatprep.subr.bf16.mxu0 0
        %291 = vmatpush1.bf16.msra.mxu0 0
        %292 = vmatprep.subr.bf16.mxu0 0
        %293 = vmatpush1.bf16.msra.mxu0 0
        %294 = vmatprep.subr.bf16.mxu0 0
        %295 = vmatpush1.bf16.msra.mxu0 0
        %296 = vmatprep.subr.bf16.mxu0 0
        %297 = vmatpush1.bf16.msra.mxu0 0
        %298 = vmatprep.subr.bf16.mxu0 0
        %299 = vmatpush1.bf16.msra.mxu0 0
        %300 = vmatprep.subr.bf16.mxu0 0
        %301 = vmatpush1.bf16.msra.mxu0 0
        %302 = vmatprep.subr.bf16.mxu0 0
        %303 = vmatpush1.bf16.msra.mxu0 0
        %304 = vmatprep.subr.bf16.mxu0 0
        %305 = vmatpush1.bf16.msra.mxu0 0
        %306 = vmatprep.subr.bf16.mxu0 0
        %307 = vmatpush1.bf16.msra.mxu0 0
        %308 = vmatprep.mubr.bf16.mxu0 0
        %309 = vmatmul.mubr.bf16.gmra.mrb[0].mxu0 %v274
        %v310 = vpop.f32.mrb[0].mxu0
        %v311 = vadd.f32 %v260, %v310
        %v312 = vpop.f32.mrb[0].mxu0
        %v313 = vpop.f32.mrb[0].mxu0
        %v314 = vadd.f32 %v260, %v313
        %v315 = vpop.f32.mrb[0].mxu0
        %316 = vdwg.mxu0
        %v317 = vld [vmem:[%s1 + $0x10] sm:$0xf]
        %v318 = vld [vmem:[%s1 + $0x14] sm:$0xf]
        %v319 = vld [vmem:[%s1 + $0x18] sm:$0xf]
        %v320 = vld [vmem:[%s1 + $0x1c] sm:$0xf]
        %v321 = vld [vmem:[%s3 + $0x2] sm:$0x1]
        %v322 = vlaneseq
        %v323 = vshrl.u32 %v322, 7
        %v324 = vsub.s32 0, %v323
        %v325 = vrot.slane %v321, %v324
        %v330 = vunpack.c.l.b16 %v317
        %v331 = vunpack.c.l.b16 %v318
        %v332 = vunpack.c.l.b16 %v319
        %v333 = vunpack.c.l.b16 %v320
        %v334 = vpack.c.b16 %v331, %v330
        %v335 = vpack.c.b16 %v333, %v332
        %338 = vmatprep.subr.bf16.mxu0 0
        %339 = vmatpush1.bf16.msra.mxu0 %v334
        %340 = vmatprep.subr.bf16.mxu0 0
        %341 = vmatpush1.bf16.msra.mxu0 %v335
        %342 = vmatprep.subr.bf16.mxu0 0
        %343 = vmatpush1.bf16.msra.mxu0 0
        %344 = vmatprep.subr.bf16.mxu0 0
        %345 = vmatpush1.bf16.msra.mxu0 0
        %346 = vmatprep.subr.bf16.mxu0 0
        %347 = vmatpush1.bf16.msra.mxu0 0
        %348 = vmatprep.subr.bf16.mxu0 0
        %349 = vmatpush1.bf16.msra.mxu0 0
        %350 = vmatprep.subr.bf16.mxu0 0
        %351 = vmatpush1.bf16.msra.mxu0 0
        %352 = vmatprep.subr.bf16.mxu0 0
        %353 = vmatpush1.bf16.msra.mxu0 0
        %354 = vmatprep.subr.bf16.mxu0 0
        %355 = vmatpush1.bf16.msra.mxu0 0
        %356 = vmatprep.subr.bf16.mxu0 0
        %357 = vmatpush1.bf16.msra.mxu0 0
        %358 = vmatprep.subr.bf16.mxu0 0
        %359 = vmatpush1.bf16.msra.mxu0 0
        %360 = vmatprep.subr.bf16.mxu0 0
        %361 = vmatpush1.bf16.msra.mxu0 0
        %362 = vmatprep.subr.bf16.mxu0 0
        %363 = vmatpush1.bf16.msra.mxu0 0
        %364 = vmatprep.subr.bf16.mxu0 0
        %365 = vmatpush1.bf16.msra.mxu0 0
        %366 = vmatprep.subr.bf16.mxu0 0
        %367 = vmatpush1.bf16.msra.mxu0 0
        %368 = vmatprep.subr.bf16.mxu0 0
        %369 = vmatpush1.bf16.msra.mxu0 0
        %370 = vmatprep.mubr.bf16.mxu0 0
        %371 = vmatmul.mubr.bf16.gmra.mrb[0].mxu0 %v274
        %v372 = vpop.f32.mrb[0].mxu0
        %v373 = vadd.f32 %v325, %v372
        %v374 = vpop.f32.mrb[0].mxu0
        %v375 = vpop.f32.mrb[0].mxu0
        %v376 = vadd.f32 %v325, %v375
        %v377 = vpop.f32.mrb[0].mxu0
        %378 = vdwg.mxu0
        %v379 = vld [vmem:[%s1 + $0x20] sm:$0xf]
        %v380 = vld [vmem:[%s1 + $0x24] sm:$0xf]
        %v381 = vld [vmem:[%s1 + $0x28] sm:$0xf]
        %v382 = vld [vmem:[%s1 + $0x2c] sm:$0xf]
        %v383 = vld [vmem:[%s3 + $0x3] sm:$0x1]
        %v384 = vlaneseq
        %v385 = vshrl.u32 %v384, 7
        %v386 = vsub.s32 0, %v385
        %v387 = vrot.slane %v383, %v386
        %v392 = vunpack.c.l.b16 %v379
        %v393 = vunpack.c.l.b16 %v380
        %v394 = vunpack.c.l.b16 %v381
        %v395 = vunpack.c.l.b16 %v382
        %v396 = vpack.c.b16 %v393, %v392
        %v397 = vpack.c.b16 %v395, %v394
        %400 = vmatprep.subr.bf16.mxu0 0
        %401 = vmatpush1.bf16.msra.mxu0 %v396
        %402 = vmatprep.subr.bf16.mxu0 0
        %403 = vmatpush1.bf16.msra.mxu0 %v397
        %404 = vmatprep.subr.bf16.mxu0 0
        %405 = vmatpush1.bf16.msra.mxu0 0
        %406 = vmatprep.subr.bf16.mxu0 0
        %407 = vmatpush1.bf16.msra.mxu0 0
        %408 = vmatprep.subr.bf16.mxu0 0
        %409 = vmatpush1.bf16.msra.mxu0 0
        %410 = vmatprep.subr.bf16.mxu0 0
        %411 = vmatpush1.bf16.msra.mxu0 0
        %412 = vmatprep.subr.bf16.mxu0 0
        %413 = vmatpush1.bf16.msra.mxu0 0
        %414 = vmatprep.subr.bf16.mxu0 0
        %415 = vmatpush1.bf16.msra.mxu0 0
        %416 = vmatprep.subr.bf16.mxu0 0
        %417 = vmatpush1.bf16.msra.mxu0 0
        %418 = vmatprep.subr.bf16.mxu0 0
        %419 = vmatpush1.bf16.msra.mxu0 0
        %420 = vmatprep.subr.bf16.mxu0 0
        %421 = vmatpush1.bf16.msra.mxu0 0
        %422 = vmatprep.subr.bf16.mxu0 0
        %423 = vmatpush1.bf16.msra.mxu0 0
        %424 = vmatprep.subr.bf16.mxu0 0
        %425 = vmatpush1.bf16.msra.mxu0 0
        %426 = vmatprep.subr.bf16.mxu0 0
        %427 = vmatpush1.bf16.msra.mxu0 0
        %428 = vmatprep.subr.bf16.mxu0 0
        %429 = vmatpush1.bf16.msra.mxu0 0
        %430 = vmatprep.subr.bf16.mxu0 0
        %431 = vmatpush1.bf16.msra.mxu0 0
        %432 = vmatprep.mubr.bf16.mxu0 0
        %433 = vmatmul.mubr.bf16.gmra.mrb[0].mxu0 %v274
        %v434 = vpop.f32.mrb[0].mxu0
        %v435 = vadd.f32 %v387, %v434
        %v436 = vpop.f32.mrb[0].mxu0
        %v437 = vpop.f32.mrb[0].mxu0
        %v438 = vadd.f32 %v387, %v437
        %v439 = vpop.f32.mrb[0].mxu0
        %440 = vdwg.mxu0
        %v441 = vld [vmem:[%s4] sm:$0xf]
        %v442 = vld [vmem:[%s4 + $0x4] sm:$0xf]
        %v443 = vld [vmem:[%s4 + $0x8] sm:$0xf]
        %v444 = vld [vmem:[%s4 + $0xc] sm:$0xf]
        %v445 = vld [vmem:[%s4 + $0x10] sm:$0xf]
        %v446 = vld [vmem:[%s4 + $0x14] sm:$0xf]
        %447 = vxpose.xlu0.b32.start [1/16] %v373, 128
        %448 = vxpose.xlu0.b32.cont [2/16] %v376, 128
        %449 = vxpose.xlu0.b32.cont [3/16] 0.0, 128
        %450 = vxpose.xlu0.b32.cont [4/16] 0.0, 128
        %451 = vxpose.xlu0.b32.cont [5/16] 0.0, 128
        %452 = vxpose.xlu0.b32.cont [6/16] 0.0, 128
        %453 = vxpose.xlu0.b32.cont [7/16] 0.0, 128
        %454 = vxpose.xlu0.b32.cont [8/16] 0.0, 128
        %455 = vxpose.xlu0.b32.cont [9/16] 0.0, 128
        %456 = vxpose.xlu0.b32.cont [10/16] 0.0, 128
        %457 = vxpose.xlu0.b32.cont [11/16] 0.0, 128
        %458 = vxpose.xlu0.b32.cont [12/16] 0.0, 128
        %459 = vxpose.xlu0.b32.cont [13/16] 0.0, 128
        %460 = vxpose.xlu0.b32.cont [14/16] 0.0, 128
        %461 = vxpose.xlu0.b32.cont [15/16] 0.0, 128
        %462 = vxpose.xlu0.b32.end [16/16] 0.0, 128
        %v463 = vpop.trf.xlu0
        %v464 = vpop.trf.xlu0
        %v465 = vpop.trf.xlu0
        %v466 = vpop.trf.xlu0
        %v467 = vpop.trf.xlu0
        %v468 = vpop.trf.xlu0
        %v469 = vpop.trf.xlu0
        %v470 = vpop.trf.xlu0
        %v471 = vpop.trf.xlu0
        %v472 = vpop.trf.xlu0
        %v473 = vpop.trf.xlu0
        %v474 = vpop.trf.xlu0
        %v475 = vpop.trf.xlu0
        %v476 = vpop.trf.xlu0
        %v477 = vpop.trf.xlu0
        %v478 = vpop.trf.xlu0
        %v479 = vpack.c.bf16 %v464, %v463
        %v480 = vpack.c.bf16 %v466, %v465
        %v483 = vunpack.c.l.b16 %v441
        %v484 = vunpack.c.l.b16 %v442
        %v485 = vpack.c.b16 %v484, %v483
        %vm487 = vcmask 130048
        %v489 = vsel %vm487, %v479, 0
        %v492 = vsel %vm487, %v480, 0
        %494 = vmatprep.subr.bf16.mxu0 0
        %495 = vmatpush1.bf16.msra.mxu0 %v485
        %496 = vmatprep.subr.bf16.mxu0 0
        %497 = vmatpush1.bf16.msra.mxu0 0
        %498 = vmatprep.subr.bf16.mxu0 0
        %499 = vmatpush1.bf16.msra.mxu0 0
        %500 = vmatprep.subr.bf16.mxu0 0
        %501 = vmatpush1.bf16.msra.mxu0 0
        %502 = vmatprep.subr.bf16.mxu0 0
        %503 = vmatpush1.bf16.msra.mxu0 0
        %504 = vmatprep.subr.bf16.mxu0 0
        %505 = vmatpush1.bf16.msra.mxu0 0
        %506 = vmatprep.subr.bf16.mxu0 0
        %507 = vmatpush1.bf16.msra.mxu0 0
        %508 = vmatprep.subr.bf16.mxu0 0
        %509 = vmatpush1.bf16.msra.mxu0 0
        %510 = vmatprep.subr.bf16.mxu0 0
        %511 = vmatpush1.bf16.msra.mxu0 0
        %512 = vmatprep.subr.bf16.mxu0 0
        %513 = vmatpush1.bf16.msra.mxu0 0
        %514 = vmatprep.subr.bf16.mxu0 0
        %515 = vmatpush1.bf16.msra.mxu0 0
        %516 = vmatprep.subr.bf16.mxu0 0
        %517 = vmatpush1.bf16.msra.mxu0 0
        %518 = vmatprep.subr.bf16.mxu0 0
        %519 = vmatpush1.bf16.msra.mxu0 0
        %520 = vmatprep.subr.bf16.mxu0 0
        %521 = vmatpush1.bf16.msra.mxu0 0
        %522 = vmatprep.subr.bf16.mxu0 0
        %523 = vmatpush1.bf16.msra.mxu0 0
        %524 = vmatprep.subr.bf16.mxu0 0
        %525 = vmatpush1.bf16.msra.mxu0 0
        %526 = vmatprep.mubr.bf16.mxu0 0
        %527 = vmatmul.mubr.bf16.gmra.mrb[0].mxu0 %v489
        %v528 = vpop.f32.mrb[0].mxu0
        %v529 = vadd.f32 0.0, %v528
        %v530 = vpop.f32.mrb[0].mxu0
        %v531 = vpop.f32.mrb[0].mxu0
        %v532 = vadd.f32 0.0, %v531
        %v533 = vpop.f32.mrb[0].mxu0
        %534 = vmatprep.mubr.bf16.mxu0 0
        %535 = vmatmul.mubr.bf16.gmra.mrb[0].mxu0 %v492
        %v536 = vpop.f32.mrb[0].mxu0
        %v537 = vadd.f32 0.0, %v536
        %v538 = vpop.f32.mrb[0].mxu0
        %v539 = vpop.f32.mrb[0].mxu0
        %v540 = vadd.f32 0.0, %v539
        %v541 = vpop.f32.mrb[0].mxu0
        %542 = vdwg.mxu0
        %v543 = vunpack.c.l.bf16 %v443
        %v544 = vunpack.c.l.bf16 %v444
        %v545 = vunpack.c.l.bf16 %v445
        %v546 = vunpack.c.l.bf16 %v446
        %v547 = vmul.f32 %v529, %v543
        %v548 = vmul.f32 %v532, %v544
        %v549 = vmul.f32 %v537, %v545
        %v550 = vmul.f32 %v540, %v546
        %v551 = vpack.c.bf16 %v548, %v547
        %v552 = vpack.c.bf16 %v550, %v549
        %v553 = vpack.c.bf16 %v314, %v311
        %v555 = vsel %vm228, %v553, 0
        %557 = vmatprep.subr.bf16.mxu0 0
        %558 = vmatpush1.bf16.msra.mxu0 %v551
        %559 = vmatprep.subr.bf16.mxu0 0
        %560 = vmatpush1.bf16.msra.mxu0 %v552
        %561 = vmatprep.subr.bf16.mxu0 0
        %562 = vmatpush1.bf16.msra.mxu0 0
        %563 = vmatprep.subr.bf16.mxu0 0
        %564 = vmatpush1.bf16.msra.mxu0 0
        %565 = vmatprep.subr.bf16.mxu0 0
        %566 = vmatpush1.bf16.msra.mxu0 0
        %567 = vmatprep.subr.bf16.mxu0 0
        %568 = vmatpush1.bf16.msra.mxu0 0
        %569 = vmatprep.subr.bf16.mxu0 0
        %570 = vmatpush1.bf16.msra.mxu0 0
        %571 = vmatprep.subr.bf16.mxu0 0
        %572 = vmatpush1.bf16.msra.mxu0 0
        %573 = vmatprep.subr.bf16.mxu0 0
        %574 = vmatpush1.bf16.msra.mxu0 0
        %575 = vmatprep.subr.bf16.mxu0 0
        %576 = vmatpush1.bf16.msra.mxu0 0
        %577 = vmatprep.subr.bf16.mxu0 0
        %578 = vmatpush1.bf16.msra.mxu0 0
        %579 = vmatprep.subr.bf16.mxu0 0
        %580 = vmatpush1.bf16.msra.mxu0 0
        %581 = vmatprep.subr.bf16.mxu0 0
        %582 = vmatpush1.bf16.msra.mxu0 0
        %583 = vmatprep.subr.bf16.mxu0 0
        %584 = vmatpush1.bf16.msra.mxu0 0
        %585 = vmatprep.subr.bf16.mxu0 0
        %586 = vmatpush1.bf16.msra.mxu0 0
        %587 = vmatprep.subr.bf16.mxu0 0
        %588 = vmatpush1.bf16.msra.mxu0 0
        %589 = vmatprep.mubr.bf16.mxu0 0
        %590 = vmatmul.mubr.bf16.gmra.mrb[0].mxu0 %v555
        %v591 = vpop.f32.mrb[0].mxu0
        %v592 = vadd.f32 0.0, %v591
        %v593 = vpop.f32.mrb[0].mxu0
        %v594 = vpop.f32.mrb[0].mxu0
        %v595 = vadd.f32 0.0, %v594
        %v596 = vpop.f32.mrb[0].mxu0
        %597 = vdwg.mxu0
        %598 = vmax.xlane.f32.xlu0 %v592
        %v599 = vpop.xlane.xlu0 %598
        %600 = vmax.xlane.f32.xlu0 %v595
        %v601 = vpop.xlane.xlu0 %600
        %v602 = vsub.f32 %v592, %v599
        %v603 = vsub.f32 %v595, %v601
        %v604 = vmul.f32 %v602, 1.442695
        %v605 = vpow.pop %v604
        %v606 = vmul.f32 %v603, 1.442695
        %v607 = vpow.pop %v606
        %v608 = vpack.c.bf16 %v607, %v605
        %v609 = vld [vmem:[%s4 + $0x18] sm:$0xf]
        %v610 = vld [vmem:[%s4 + $0x1c] sm:$0xf]
        %v611 = vld [vmem:[%s4 + $0x20] sm:$0xf]
        %v612 = vld [vmem:[%s4 + $0x24] sm:$0xf]
        %v613 = vld [vmem:[%s4 + $0x28] sm:$0xf]
        %v614 = vld [vmem:[%s4 + $0x2c] sm:$0xf]
        %v615 = vld [vmem:[%s4 + $0x30] sm:$0xf]
        %v616 = vld [vmem:[%s4 + $0x34] sm:$0xf]
        %v617 = vld [vmem:[%s4 + $0x38] sm:$0xf]
        %v618 = vld [vmem:[%s4 + $0x3c] sm:$0xf]
        %v619 = vld [vmem:[%s4 + $0x40] sm:$0xf]
        %v620 = vld [vmem:[%s4 + $0x44] sm:$0xf]
        %v621 = vld [vmem:[%s4 + $0x48] sm:$0xf]
        %v622 = vld [vmem:[%s4 + $0x4c] sm:$0xf]
        %v623 = vld [vmem:[%s4 + $0x50] sm:$0xf]
        %v624 = vld [vmem:[%s4 + $0x54] sm:$0xf]
        %v625 = vld [vmem:[%s4 + $0x58] sm:$0xf]
        %v626 = vld [vmem:[%s4 + $0x5c] sm:$0xf]
        %v627 = vld [vmem:[%s4 + $0x60] sm:$0xf]
        %v628 = vld [vmem:[%s4 + $0x64] sm:$0xf]
        %v629 = vld [vmem:[%s4 + $0x68] sm:$0xf]
        %v630 = vld [vmem:[%s4 + $0x6c] sm:$0xf]
        %v631 = vld [vmem:[%s4 + $0x70] sm:$0xf]
        %v632 = vld [vmem:[%s4 + $0x74] sm:$0xf]
        %v633 = vld [vmem:[%s4 + $0x78] sm:$0xf]
        %v634 = vld [vmem:[%s4 + $0x7c] sm:$0xf]
        %v635 = vld [vmem:[%s4 + $0x80] sm:$0xf]
        %v636 = vld [vmem:[%s4 + $0x84] sm:$0xf]
        %v637 = vld [vmem:[%s4 + $0x88] sm:$0xf]
        %v638 = vld [vmem:[%s4 + $0x8c] sm:$0xf]
        %v639 = vld [vmem:[%s4 + $0x90] sm:$0xf]
        %v640 = vld [vmem:[%s4 + $0x94] sm:$0xf]
        %v641 = vpack.c.bf16 %v438, %v435
        %v658 = vunpack.c.l.b16 %v609
        %v659 = vunpack.c.l.b16 %v610
        %v660 = vunpack.c.l.b16 %v611
        %v661 = vunpack.c.l.b16 %v612
        %v662 = vunpack.c.l.b16 %v613
        %v663 = vunpack.c.l.b16 %v614
        %v664 = vunpack.c.l.b16 %v615
        %v665 = vunpack.c.l.b16 %v616
        %v666 = vunpack.c.l.b16 %v617
        %v667 = vunpack.c.l.b16 %v618
        %v668 = vunpack.c.l.b16 %v619
        %v669 = vunpack.c.l.b16 %v620
        %v670 = vunpack.c.l.b16 %v621
        %v671 = vunpack.c.l.b16 %v622
        %v672 = vunpack.c.l.b16 %v623
        %v673 = vunpack.c.l.b16 %v624
        %v674 = vpack.c.b16 %v659, %v658
        %v675 = vpack.c.b16 %v661, %v660
        %v676 = vpack.c.b16 %v663, %v662
        %v677 = vpack.c.b16 %v665, %v664
        %v678 = vpack.c.b16 %v667, %v666
        %v679 = vpack.c.b16 %v669, %v668
        %v680 = vpack.c.b16 %v671, %v670
        %v681 = vpack.c.b16 %v673, %v672
        %v683 = vsel %vm487, %v674, 0
        %v686 = vsel %vm487, %v675, 0
        %v689 = vsel %vm487, %v676, 0
        %v692 = vsel %vm487, %v677, 0
        %v695 = vsel %vm487, %v678, 0
        %v698 = vsel %vm487, %v679, 0
        %v701 = vsel %vm487, %v680, 0
        %v704 = vsel %vm487, %v681, 0
        %706 = vmatprep.subr.bf16.mxu0 0
        %707 = vmatpush1.bf16.msra.mxu0 %v641
        %708 = vmatprep.subr.bf16.mxu0 0
        %709 = vmatpush1.bf16.msra.mxu0 0
        %710 = vmatprep.subr.bf16.mxu0 0
        %711 = vmatpush1.bf16.msra.mxu0 0
        %712 = vmatprep.subr.bf16.mxu0 0
        %713 = vmatpush1.bf16.msra.mxu0 0
        %714 = vmatprep.subr.bf16.mxu0 0
        %715 = vmatpush1.bf16.msra.mxu0 0
        %716 = vmatprep.subr.bf16.mxu0 0
        %717 = vmatpush1.bf16.msra.mxu0 0
        %718 = vmatprep.subr.bf16.mxu0 0
        %719 = vmatpush1.bf16.msra.mxu0 0
        %720 = vmatprep.subr.bf16.mxu0 0
        %721 = vmatpush1.bf16.msra.mxu0 0
        %722 = vmatprep.subr.bf16.mxu0 0
        %723 = vmatpush1.bf16.msra.mxu0 0
        %724 = vmatprep.subr.bf16.mxu0 0
        %725 = vmatpush1.bf16.msra.mxu0 0
        %726 = vmatprep.subr.bf16.mxu0 0
        %727 = vmatpush1.bf16.msra.mxu0 0
        %728 = vmatprep.subr.bf16.mxu0 0
        %729 = vmatpush1.bf16.msra.mxu0 0
        %730 = vmatprep.subr.bf16.mxu0 0
        %731 = vmatpush1.bf16.msra.mxu0 0
        %732 = vmatprep.subr.bf16.mxu0 0
        %733 = vmatpush1.bf16.msra.mxu0 0
        %734 = vmatprep.subr.bf16.mxu0 0
        %735 = vmatpush1.bf16.msra.mxu0 0
        %736 = vmatprep.subr.bf16.mxu0 0
        %737 = vmatpush1.bf16.msra.mxu0 0
        %738 = vmatprep.mubr.bf16.mxu0 0
        %739 = vmatmul.mubr.bf16.gmra.mrb[0].mxu0 %v683
        %v740 = vpop.f32.mrb[0].mxu0
        %v741 = vadd.f32 0.0, %v740
        %v742 = vpop.f32.mrb[0].mxu0
        %v743 = vpop.f32.mrb[0].mxu0
        %v744 = vadd.f32 0.0, %v743
        %v745 = vpop.f32.mrb[0].mxu0
        %746 = vmatprep.mubr.bf16.mxu0 0
        %747 = vmatmul.mubr.bf16.gmra.mrb[0].mxu0 %v686
        %v748 = vpop.f32.mrb[0].mxu0
        %v749 = vadd.f32 0.0, %v748
        %v750 = vpop.f32.mrb[0].mxu0
        %v751 = vpop.f32.mrb[0].mxu0
        %v752 = vadd.f32 0.0, %v751
        %v753 = vpop.f32.mrb[0].mxu0
        %754 = vmatprep.mubr.bf16.mxu0 0
        %755 = vmatmul.mubr.bf16.gmra.mrb[0].mxu0 %v689
        %v756 = vpop.f32.mrb[0].mxu0
        %v757 = vadd.f32 0.0, %v756
        %v758 = vpop.f32.mrb[0].mxu0
        %v759 = vpop.f32.mrb[0].mxu0
        %v760 = vadd.f32 0.0, %v759
        %v761 = vpop.f32.mrb[0].mxu0
        %762 = vmatprep.mubr.bf16.mxu0 0
        %763 = vmatmul.mubr.bf16.gmra.mrb[0].mxu0 %v692
        %v764 = vpop.f32.mrb[0].mxu0
        %v765 = vadd.f32 0.0, %v764
        %v766 = vpop.f32.mrb[0].mxu0
        %v767 = vpop.f32.mrb[0].mxu0
        %v768 = vadd.f32 0.0, %v767
        %v769 = vpop.f32.mrb[0].mxu0
        %770 = vmatprep.mubr.bf16.mxu0 0
        %771 = vmatmul.mubr.bf16.gmra.mrb[0].mxu0 %v695
        %v772 = vpop.f32.mrb[0].mxu0
        %v773 = vadd.f32 0.0, %v772
        %v774 = vpop.f32.mrb[0].mxu0
        %v775 = vpop.f32.mrb[0].mxu0
        %v776 = vadd.f32 0.0, %v775
        %v777 = vpop.f32.mrb[0].mxu0
        %778 = vmatprep.mubr.bf16.mxu0 0
        %779 = vmatmul.mubr.bf16.gmra.mrb[0].mxu0 %v698
        %v780 = vpop.f32.mrb[0].mxu0
        %v781 = vadd.f32 0.0, %v780
        %v782 = vpop.f32.mrb[0].mxu0
        %v783 = vpop.f32.mrb[0].mxu0
        %v784 = vadd.f32 0.0, %v783
        %v785 = vpop.f32.mrb[0].mxu0
        %786 = vmatprep.mubr.bf16.mxu0 0
        %787 = vmatmul.mubr.bf16.gmra.mrb[0].mxu0 %v701
        %v788 = vpop.f32.mrb[0].mxu0
        %v789 = vadd.f32 0.0, %v788
        %v790 = vpop.f32.mrb[0].mxu0
        %v791 = vpop.f32.mrb[0].mxu0
        %v792 = vadd.f32 0.0, %v791
        %v793 = vpop.f32.mrb[0].mxu0
        %794 = vmatprep.mubr.bf16.mxu0 0
        %795 = vmatmul.mubr.bf16.gmra.mrb[0].mxu0 %v704
        %v796 = vpop.f32.mrb[0].mxu0
        %v797 = vadd.f32 0.0, %v796
        %v798 = vpop.f32.mrb[0].mxu0
        %v799 = vpop.f32.mrb[0].mxu0
        %v800 = vadd.f32 0.0, %v799
        %v801 = vpop.f32.mrb[0].mxu0
        %802 = vdwg.mxu0
        %v803 = vunpack.c.l.bf16 %v625
        %v804 = vunpack.c.l.bf16 %v626
        %v805 = vunpack.c.l.bf16 %v627
        %v806 = vunpack.c.l.bf16 %v628
        %v807 = vunpack.c.l.bf16 %v629
        %v808 = vunpack.c.l.bf16 %v630
        %v809 = vunpack.c.l.bf16 %v631
        %v810 = vunpack.c.l.bf16 %v632
        %v811 = vunpack.c.l.bf16 %v633
        %v812 = vunpack.c.l.bf16 %v634
        %v813 = vunpack.c.l.bf16 %v635
        %v814 = vunpack.c.l.bf16 %v636
        %v815 = vunpack.c.l.bf16 %v637
        %v816 = vunpack.c.l.bf16 %v638
        %v817 = vunpack.c.l.bf16 %v639
        %v818 = vunpack.c.l.bf16 %v640
        %v819 = vmul.f32 %v741, %v803
        %v820 = vmul.f32 %v744, %v804
        %v821 = vmul.f32 %v749, %v805
        %v822 = vmul.f32 %v752, %v806
        %v823 = vmul.f32 %v757, %v807
        %v824 = vmul.f32 %v760, %v808
        %v825 = vmul.f32 %v765, %v809
        %v826 = vmul.f32 %v768, %v810
        %v827 = vmul.f32 %v773, %v811
        %v828 = vmul.f32 %v776, %v812
        %v829 = vmul.f32 %v781, %v813
        %v830 = vmul.f32 %v784, %v814
        %v831 = vmul.f32 %v789, %v815
        %v832 = vmul.f32 %v792, %v816
        %v833 = vmul.f32 %v797, %v817
        %v834 = vmul.f32 %v800, %v818
        %v835 = vpack.c.bf16 %v820, %v819
        %v836 = vpack.c.bf16 %v822, %v821
        %v837 = vpack.c.bf16 %v824, %v823
        %v838 = vpack.c.bf16 %v826, %v825
        %v839 = vpack.c.bf16 %v828, %v827
        %v840 = vpack.c.bf16 %v830, %v829
        %v841 = vpack.c.bf16 %v832, %v831
        %v842 = vpack.c.bf16 %v834, %v833
        %843 = vmatprep.subr.bf16.mxu0 0
        %844 = vmatpush1.bf16.msra.mxu0 %v835
        %845 = vmatprep.subr.bf16.mxu0 0
        %846 = vmatpush1.bf16.msra.mxu0 %v836
        %847 = vmatprep.subr.bf16.mxu0 0
        %848 = vmatpush1.bf16.msra.mxu0 %v837
        %849 = vmatprep.subr.bf16.mxu0 0
        %850 = vmatpush1.bf16.msra.mxu0 %v838
        %851 = vmatprep.subr.bf16.mxu0 0
        %852 = vmatpush1.bf16.msra.mxu0 %v839
        %853 = vmatprep.subr.bf16.mxu0 0
        %854 = vmatpush1.bf16.msra.mxu0 %v840
        %855 = vmatprep.subr.bf16.mxu0 0
        %856 = vmatpush1.bf16.msra.mxu0 %v841
        %857 = vmatprep.subr.bf16.mxu0 0
        %858 = vmatpush1.bf16.msra.mxu0 %v842
        %859 = vmatprep.subr.bf16.mxu0 0
        %860 = vmatpush1.bf16.msra.mxu0 0
        %861 = vmatprep.subr.bf16.mxu0 0
        %862 = vmatpush1.bf16.msra.mxu0 0
        %863 = vmatprep.subr.bf16.mxu0 0
        %864 = vmatpush1.bf16.msra.mxu0 0
        %865 = vmatprep.subr.bf16.mxu0 0
        %866 = vmatpush1.bf16.msra.mxu0 0
        %867 = vmatprep.subr.bf16.mxu0 0
        %868 = vmatpush1.bf16.msra.mxu0 0
        %869 = vmatprep.subr.bf16.mxu0 0
        %870 = vmatpush1.bf16.msra.mxu0 0
        %871 = vmatprep.subr.bf16.mxu0 0
        %872 = vmatpush1.bf16.msra.mxu0 0
        %873 = vmatprep.subr.bf16.mxu0 0
        %874 = vmatpush1.bf16.msra.mxu0 0
        %875 = vmatprep.mubr.bf16.mxu0 0
        %876 = vmatmul.mubr.bf16.gmra.mrb[0].mxu0 %v608
        %v877 = vpop.f32.mrb[0].mxu0
        %v878 = vadd.f32 0.0, %v877
        %v879 = vpop.f32.mrb[0].mxu0
        %v880 = vpop.f32.mrb[0].mxu0
        %v881 = vadd.f32 0.0, %v880
        %v882 = vpop.f32.mrb[0].mxu0
        %883 = vdwg.mxu0
        %v900 = vunpack.c.l.b16 %v625
        %v901 = vunpack.c.l.b16 %v626
        %v902 = vunpack.c.l.b16 %v627
        %v903 = vunpack.c.l.b16 %v628
        %v904 = vunpack.c.l.b16 %v629
        %v905 = vunpack.c.l.b16 %v630
        %v906 = vunpack.c.l.b16 %v631
        %v907 = vunpack.c.l.b16 %v632
        %v908 = vunpack.c.l.b16 %v633
        %v909 = vunpack.c.l.b16 %v634
        %v910 = vunpack.c.l.b16 %v635
        %v911 = vunpack.c.l.b16 %v636
        %v912 = vunpack.c.l.b16 %v637
        %v913 = vunpack.c.l.b16 %v638
        %v914 = vunpack.c.l.b16 %v639
        %v915 = vunpack.c.l.b16 %v640
        %v916 = vpack.c.b16 %v901, %v900
        %v917 = vpack.c.b16 %v903, %v902
        %v918 = vpack.c.b16 %v905, %v904
        %v919 = vpack.c.b16 %v907, %v906
        %v920 = vpack.c.b16 %v909, %v908
        %v921 = vpack.c.b16 %v911, %v910
        %v922 = vpack.c.b16 %v913, %v912
        %v923 = vpack.c.b16 %v915, %v914
        %932 = vmatprep.subr.bf16.mxu0 0
        %933 = vmatpush1.bf16.msra.mxu0 %v916
        %934 = vmatprep.subr.bf16.mxu0 0
        %935 = vmatpush1.bf16.msra.mxu0 %v917
        %936 = vmatprep.subr.bf16.mxu0 0
        %937 = vmatpush1.bf16.msra.mxu0 %v918
        %938 = vmatprep.subr.bf16.mxu0 0
        %939 = vmatpush1.bf16.msra.mxu0 %v919
        %940 = vmatprep.subr.bf16.mxu0 0
        %941 = vmatpush1.bf16.msra.mxu0 %v920
        %942 = vmatprep.subr.bf16.mxu0 0
        %943 = vmatpush1.bf16.msra.mxu0 %v921
        %944 = vmatprep.subr.bf16.mxu0 0
        %945 = vmatpush1.bf16.msra.mxu0 %v922
        %946 = vmatprep.subr.bf16.mxu0 0
        %947 = vmatpush1.bf16.msra.mxu0 %v923
        %948 = vmatprep.subr.bf16.mxu0 0
        %949 = vmatpush1.bf16.msra.mxu0 0
        %950 = vmatprep.subr.bf16.mxu0 0
        %951 = vmatpush1.bf16.msra.mxu0 0
        %952 = vmatprep.subr.bf16.mxu0 0
        %953 = vmatpush1.bf16.msra.mxu0 0
        %954 = vmatprep.subr.bf16.mxu0 0
        %955 = vmatpush1.bf16.msra.mxu0 0
        %956 = vmatprep.subr.bf16.mxu0 0
        %957 = vmatpush1.bf16.msra.mxu0 0
        %958 = vmatprep.subr.bf16.mxu0 0
        %959 = vmatpush1.bf16.msra.mxu0 0
        %960 = vmatprep.subr.bf16.mxu0 0
        %961 = vmatpush1.bf16.msra.mxu0 0
        %962 = vmatprep.subr.bf16.mxu0 0
        %963 = vmatpush1.bf16.msra.mxu0 0
        %964 = vmatprep.mubr.bf16.mxu0 0
        %965 = vmatmul.mubr.bf16.gmra.mrb[0].mxu0 %v608
        %v966 = vpop.f32.mrb[0].mxu0
        %v967 = vadd.f32 0.0, %v966
        %v968 = vpop.f32.mrb[0].mxu0
        %v969 = vpop.f32.mrb[0].mxu0
        %v970 = vadd.f32 0.0, %v969
        %v971 = vpop.f32.mrb[0].mxu0
        %972 = vdwg.mxu0
        %v973 = vrcp.pop %v967
        %v974 = vrcp.pop %v970
        %v975 = vmul.f32 %v878, %v973
        %v976 = vmul.f32 %v881, %v974
        %v977 = vpack.c.bf16 %v976, %v975
        %v978 = vld [vmem:[%s1 + $0x30] sm:$0xf]
        %v979 = vld [vmem:[%s1 + $0x34] sm:$0xf]
        %v980 = vld [vmem:[%s1 + $0x38] sm:$0xf]
        %v981 = vld [vmem:[%s1 + $0x3c] sm:$0xf]
        %v982 = vld [vmem:[%s3 + $0x4] sm:$0x1]
        %v983 = vlaneseq
        %v984 = vshrl.u32 %v983, 7
        %v985 = vsub.s32 0, %v984
        %v986 = vrot.slane %v982, %v985
        %v991 = vunpack.c.l.b16 %v978
        %v992 = vunpack.c.l.b16 %v979
        %v993 = vunpack.c.l.b16 %v980
        %v994 = vunpack.c.l.b16 %v981
        %v995 = vpack.c.b16 %v992, %v991
        %v996 = vpack.c.b16 %v994, %v993
        %v1000 = vsel %vm228, %v977, 0
        %1002 = vmatprep.subr.bf16.mxu0 0
        %1003 = vmatpush1.bf16.msra.mxu0 %v995
        %1004 = vmatprep.subr.bf16.mxu0 0
        %1005 = vmatpush1.bf16.msra.mxu0 %v996
        %1006 = vmatprep.subr.bf16.mxu0 0
        %1007 = vmatpush1.bf16.msra.mxu0 0
        %1008 = vmatprep.subr.bf16.mxu0 0
        %1009 = vmatpush1.bf16.msra.mxu0 0
        %1010 = vmatprep.subr.bf16.mxu0 0
        %1011 = vmatpush1.bf16.msra.mxu0 0
        %1012 = vmatprep.subr.bf16.mxu0 0
        %1013 = vmatpush1.bf16.msra.mxu0 0
        %1014 = vmatprep.subr.bf16.mxu0 0
        %1015 = vmatpush1.bf16.msra.mxu0 0
        %1016 = vmatprep.subr.bf16.mxu0 0
        %1017 = vmatpush1.bf16.msra.mxu0 0
        %1018 = vmatprep.subr.bf16.mxu0 0
        %1019 = vmatpush1.bf16.msra.mxu0 0
        %1020 = vmatprep.subr.bf16.mxu0 0
        %1021 = vmatpush1.bf16.msra.mxu0 0
        %1022 = vmatprep.subr.bf16.mxu0 0
        %1023 = vmatpush1.bf16.msra.mxu0 0
        %1024 = vmatprep.subr.bf16.mxu0 0
        %1025 = vmatpush1.bf16.msra.mxu0 0
        %1026 = vmatprep.subr.bf16.mxu0 0
        %1027 = vmatpush1.bf16.msra.mxu0 0
        %1028 = vmatprep.subr.bf16.mxu0 0
        %1029 = vmatpush1.bf16.msra.mxu0 0
        %1030 = vmatprep.subr.bf16.mxu0 0
        %1031 = vmatpush1.bf16.msra.mxu0 0
        %1032 = vmatprep.subr.bf16.mxu0 0
        %1033 = vmatpush1.bf16.msra.mxu0 0
        %1034 = vmatprep.mubr.bf16.mxu0 0
        %1035 = vmatmul.mubr.bf16.gmra.mrb[0].mxu0 %v1000
        %v1036 = vpop.f32.mrb[0].mxu0
        %v1037 = vadd.f32 %v986, %v1036
        %v1038 = vpop.f32.mrb[0].mxu0
        %v1039 = vpop.f32.mrb[0].mxu0
        %v1040 = vadd.f32 %v986, %v1039
        %v1041 = vpop.f32.mrb[0].mxu0
        %1042 = vdwg.mxu0
        %v1043 = vadd.f32 %v1037, %v224
        %v1044 = vadd.f32 %v1040, %v225
        %v1045 = vld [vmem:[%s3 + $0xe] sm:$0x1]
        %v1046 = vld [vmem:[%s3 + $0xf] sm:$0x1]
        %v1047 = vld [vmem:[%s3 + $0x10] sm:$0x1]
        %v1048 = vpack.c.bf16 %v1044, %v1043
        %v1049 = vld [vmem:[%s2] sm:$0xf]
        %v1050 = vld [vmem:[%s2 + $0x4] sm:$0xf]
        %v1051 = vld [vmem:[%s2 + $0x8] sm:$0xf]
        %v1052 = vld [vmem:[%s2 + $0xc] sm:$0xf]
        %v1053 = vld [vmem:[%s3 + $0x5] sm:$0x1]
        %v1054 = vlaneseq
        %v1055 = vshrl.u32 %v1054, 7
        %v1056 = vsub.s32 0, %v1055
        %v1057 = vrot.slane %v1053, %v1056
        %v1062 = vunpack.c.l.b16 %v1049
        %v1063 = vunpack.c.l.b16 %v1050
        %v1064 = vunpack.c.l.b16 %v1051
        %v1065 = vunpack.c.l.b16 %v1052
        %v1066 = vpack.c.b16 %v1063, %v1062
        %v1067 = vpack.c.b16 %v1065, %v1064
        %v1071 = vsel %vm228, %v1048, 0
        %1073 = vmatprep.subr.bf16.mxu0 0
        %1074 = vmatpush1.bf16.msra.mxu0 %v1066
        %1075 = vmatprep.subr.bf16.mxu0 0
        %1076 = vmatpush1.bf16.msra.mxu0 %v1067
        %1077 = vmatprep.subr.bf16.mxu0 0
        %1078 = vmatpush1.bf16.msra.mxu0 0
        %1079 = vmatprep.subr.bf16.mxu0 0
        %1080 = vmatpush1.bf16.msra.mxu0 0
        %1081 = vmatprep.subr.bf16.mxu0 0
        %1082 = vmatpush1.bf16.msra.mxu0 0
        %1083 = vmatprep.subr.bf16.mxu0 0
        %1084 = vmatpush1.bf16.msra.mxu0 0
        %1085 = vmatprep.subr.bf16.mxu0 0
        %1086 = vmatpush1.bf16.msra.mxu0 0
        %1087 = vmatprep.subr.bf16.mxu0 0
        %1088 = vmatpush1.bf16.msra.mxu0 0
        %1089 = vmatprep.subr.bf16.mxu0 0
        %1090 = vmatpush1.bf16.msra.mxu0 0
        %1091 = vmatprep.subr.bf16.mxu0 0
        %1092 = vmatpush1.bf16.msra.mxu0 0
        %1093 = vmatprep.subr.bf16.mxu0 0
        %1094 = vmatpush1.bf16.msra.mxu0 0
        %1095 = vmatprep.subr.bf16.mxu0 0
        %1096 = vmatpush1.bf16.msra.mxu0 0
        %1097 = vmatprep.subr.bf16.mxu0 0
        %1098 = vmatpush1.bf16.msra.mxu0 0
        %1099 = vmatprep.subr.bf16.mxu0 0
        %1100 = vmatpush1.bf16.msra.mxu0 0
        %1101 = vmatprep.subr.bf16.mxu0 0
        %1102 = vmatpush1.bf16.msra.mxu0 0
        %1103 = vmatprep.subr.bf16.mxu0 0
        %1104 = vmatpush1.bf16.msra.mxu0 0
        %1105 = vmatprep.mubr.bf16.mxu0 0
        %1106 = vmatmul.mubr.bf16.gmra.mrb[0].mxu0 %v1071
        %v1107 = vpop.f32.mrb[0].mxu0
        %v1108 = vadd.f32 %v1057, %v1107
        %v1109 = vpop.f32.mrb[0].mxu0
        %v1110 = vpop.f32.mrb[0].mxu0
        %v1111 = vadd.f32 %v1057, %v1110
        %v1112 = vpop.f32.mrb[0].mxu0
        %1113 = vdwg.mxu0
        %vm1114 = vcmp.gt.f32.partialorder %v1108, 0.0
        %vm1115 = vcmp.gt.f32.partialorder %v1111, 0.0
        %v1116 = vlaneseq
        %v1117 = vshrl.u32 %v1116, 7
        %v1118 = vsub.s32 0, %v1117
        %v1119 = vrot.slane %v1045, %v1118
        %v1120 = vmul.f32 %v1119, %v1108
        %v1121 = vmul.f32 %v1119, %v1111
        %v1122 = vsel %vm1114, %v1108, %v1120
        %v1123 = vsel %vm1115, %v1111, %v1121
        %v1124 = vld [vmem:[%s3 + $0x6] sm:$0x1]
        %v1125 = vld [vmem:[%s3 + $0x7] sm:$0x1]
        %vm1126 = vcmask 523264
        %v1127 = vsel %vm1126, %v1122, 0.0
        %v1128 = vsel %vm1126, %v1123, 0.0
        %v1129 = vadd.f32 %v1127, %v1128
        %1130 = vadd.xlane.f32.xlu0 %v1129
        %v1131 = vpop.xlane.xlu0 %1130
        %v1132 = vrot.slane %v1131, 4
        %v1133 = vadd.f32 %v1131, %v1132
        %v1134 = vrot.slane %v1133, 2
        %v1135 = vadd.f32 %v1133, %v1134
        %v1136 = vrot.slane %v1135, 1
        %v1137 = vadd.f32 %v1135, %v1136
        %s1138 = vtos %v1137
        %s1139 = smul.f32 %s1138, 0.0009765625
        %v1140 = vmul.f32 %v1122, %v1122
        %v1141 = vmul.f32 %v1123, %v1123
        %v1142 = vsel %vm1126, %v1140, 0.0
        %v1143 = vsel %vm1126, %v1141, 0.0
        %v1144 = vadd.f32 %v1142, %v1143
        %1145 = vadd.xlane.f32.xlu0 %v1144
        %v1146 = vpop.xlane.xlu0 %1145
        %v1147 = vrot.slane %v1146, 4
        %v1148 = vadd.f32 %v1146, %v1147
        %v1149 = vrot.slane %v1148, 2
        %v1150 = vadd.f32 %v1148, %v1149
        %v1151 = vrot.slane %v1150, 1
        %v1152 = vadd.f32 %v1150, %v1151
        %s1153 = vtos %v1152
        %s1154 = smul.f32 %s1153, 0.0009765625
        %s1155 = smul.f32 %s1139, %s1139
        %s1156 = ssub.f32 %s1154, %s1155
        %s1157 = smax.f32 %s1156, 0.0
        %v1158 = vstv %s1139
        %v1159 = vsub.f32 %v1122, %v1158
        %v1160 = vsub.f32 %v1123, %v1158
        %s1161 = sadd.f32 %s1157, 1e-08
        %v1162 = vstv %s1161
        %v1163 = vrsqrt.pop %v1162
        %s1164 = vtos %v1163
        %v1165 = vstv %s1164
        %v1166 = vmul.f32 %v1159, %v1165
        %v1167 = vmul.f32 %v1160, %v1165
        %v1168 = vlaneseq
        %v1169 = vshrl.u32 %v1168, 7
        %v1170 = vsub.s32 0, %v1169
        %v1171 = vrot.slane %v1124, %v1170
        %v1172 = vmul.f32 %v1166, %v1171
        %v1173 = vmul.f32 %v1167, %v1171
        %v1174 = vlaneseq
        %v1175 = vshrl.u32 %v1174, 7
        %v1176 = vsub.s32 0, %v1175
        %v1177 = vrot.slane %v1125, %v1176
        %v1178 = vadd.f32 %v1172, %v1177
        %v1179 = vadd.f32 %v1173, %v1177
        %v1180 = vld [vmem:[%s3 + $0x58] sm:$0xff]
        %v1181 = vld [vmem:[%s3 + $0x60] sm:$0xff]
        %v1182 = vmul.f32 %v1178, %v1180
        %v1183 = vmul.f32 %v1179, %v1181
        %v1184 = vrot.slane %v1178, 6
        %v1185 = vrot.slane %v1179, 6
        %v1186 = vlaneseq
        %v1187 = vshrl.u32 %v1186, 7
        %vm1188 = vcmp.lt.s32.totalorder %v1187, 2
        %v1189 = vsel %vm1188, %v1184, %v1185
        %v1190 = vsel %vm1188, %v1185, %v1184
        %v1191 = vld [vmem:[%s3 + $0x18] sm:$0xff]
        %v1192 = vld [vmem:[%s3 + $0x20] sm:$0xff]
        %v1193 = vmul.f32 %v1190, %v1191
        %v1194 = vmul.f32 %v1189, %v1192
        %v1195 = vadd.f32 %v1182, %v1193
        %v1196 = vadd.f32 %v1183, %v1194
        %v1197 = vrot.slane %v1178, 7
        %v1198 = vrot.slane %v1179, 7
        %vm1199 = vcmp.lt.s32.totalorder %v1187, 1
        %v1200 = vsel %vm1199, %v1197, %v1198
        %v1201 = vsel %vm1199, %v1198, %v1197
        %v1202 = vld [vmem:[%s3 + $0x28] sm:$0xff]
        %v1203 = vld [vmem:[%s3 + $0x30] sm:$0xff]
        %v1204 = vmul.f32 %v1201, %v1202
        %v1205 = vmul.f32 %v1200, %v1203
        %v1206 = vadd.f32 %v1195, %v1204
        %v1207 = vadd.f32 %v1196, %v1205
        %v1208 = vrot.slane %v1178, 1
        %v1209 = vrot.slane %v1179, 1
        %vm1210 = vcmp.lt.s32.totalorder %v1187, 7
        %v1211 = vsel %vm1210, %v1208, %v1209
        %v1212 = vsel %vm1210, %v1209, %v1208
        %v1213 = vld [vmem:[%s3 + $0x38] sm:$0xff]
        %v1214 = vld [vmem:[%s3 + $0x40] sm:$0xff]
        %v1215 = vmul.f32 %v1211, %v1213
        %v1216 = vmul.f32 %v1212, %v1214
        %v1217 = vadd.f32 %v1206, %v1215
        %v1218 = vadd.f32 %v1207, %v1216
        %v1219 = vrot.slane %v1178, 2
        %v1220 = vrot.slane %v1179, 2
        %vm1221 = vcmp.lt.s32.totalorder %v1187, 6
        %v1222 = vsel %vm1221, %v1219, %v1220
        %v1223 = vsel %vm1221, %v1220, %v1219
        %v1224 = vld [vmem:[%s3 + $0x48] sm:$0xff]
        %v1225 = vld [vmem:[%s3 + $0x50] sm:$0xff]
        %v1226 = vmul.f32 %v1222, %v1224
        %v1227 = vmul.f32 %v1223, %v1225
        %v1228 = vadd.f32 %v1217, %v1226
        %v1229 = vadd.f32 %v1218, %v1227
        %v1230 = vld [vmem:[%s3 + $0x8] sm:$0x1]
        %v1231 = vlaneseq
        %v1232 = vshrl.u32 %v1231, 7
        %v1233 = vsub.s32 0, %v1232
        %v1234 = vrot.slane %v1230, %v1233
        %v1235 = vadd.f32 %v1228, %v1234
        %v1236 = vadd.f32 %v1229, %v1234
        %vm1237 = vcmp.gt.f32.partialorder %v1235, 0.0
        %vm1238 = vcmp.gt.f32.partialorder %v1236, 0.0
        %v1239 = vlaneseq
        %v1240 = vshrl.u32 %v1239, 7
        %v1241 = vsub.s32 0, %v1240
        %v1242 = vrot.slane %v1046, %v1241
        %v1243 = vmul.f32 %v1242, %v1235
        %v1244 = vmul.f32 %v1242, %v1236
        %v1245 = vsel %vm1237, %v1235, %v1243
        %v1246 = vsel %vm1238, %v1236, %v1244
        %v1247 = vld [vmem:[%s3 + $0x9] sm:$0x1]
        %v1248 = vld [vmem:[%s3 + $0xa] sm:$0x1]
        %v1249 = vsel %vm1126, %v1245, 0.0
        %v1250 = vsel %vm1126, %v1246, 0.0
        %v1251 = vadd.f32 %v1249, %v1250
        %1252 = vadd.xlane.f32.xlu0 %v1251
        %v1253 = vpop.xlane.xlu0 %1252
        %v1254 = vrot.slane %v1253, 4
        %v1255 = vadd.f32 %v1253, %v1254
        %v1256 = vrot.slane %v1255, 2
        %v1257 = vadd.f32 %v1255, %v1256
        %v1258 = vrot.slane %v1257, 1
        %v1259 = vadd.f32 %v1257, %v1258
        %s1260 = vtos %v1259
        %s1261 = smul.f32 %s1260, 0.0009765625
        %v1262 = vmul.f32 %v1245, %v1245
        %v1263 = vmul.f32 %v1246, %v1246
        %v1264 = vsel %vm1126, %v1262, 0.0
        %v1265 = vsel %vm1126, %v1263, 0.0
        %v1266 = vadd.f32 %v1264, %v1265
        %1267 = vadd.xlane.f32.xlu0 %v1266
        %v1268 = vpop.xlane.xlu0 %1267
        %v1269 = vrot.slane %v1268, 4
        %v1270 = vadd.f32 %v1268, %v1269
        %v1271 = vrot.slane %v1270, 2
        %v1272 = vadd.f32 %v1270, %v1271
        %v1273 = vrot.slane %v1272, 1
        %v1274 = vadd.f32 %v1272, %v1273
        %s1275 = vtos %v1274
        %s1276 = smul.f32 %s1275, 0.0009765625
        %s1277 = smul.f32 %s1261, %s1261
        %s1278 = ssub.f32 %s1276, %s1277
        %s1279 = smax.f32 %s1278, 0.0
        %v1280 = vstv %s1261
        %v1281 = vsub.f32 %v1245, %v1280
        %v1282 = vsub.f32 %v1246, %v1280
        %s1283 = sadd.f32 %s1279, 1e-08
        %v1284 = vstv %s1283
        %v1285 = vrsqrt.pop %v1284
        %s1286 = vtos %v1285
        %v1287 = vstv %s1286
        %v1288 = vmul.f32 %v1281, %v1287
        %v1289 = vmul.f32 %v1282, %v1287
        %v1290 = vlaneseq
        %v1291 = vshrl.u32 %v1290, 7
        %v1292 = vsub.s32 0, %v1291
        %v1293 = vrot.slane %v1247, %v1292
        %v1294 = vmul.f32 %v1288, %v1293
        %v1295 = vmul.f32 %v1289, %v1293
        %v1296 = vlaneseq
        %v1297 = vshrl.u32 %v1296, 7
        %v1298 = vsub.s32 0, %v1297
        %v1299 = vrot.slane %v1248, %v1298
        %v1300 = vadd.f32 %v1294, %v1299
        %v1301 = vadd.f32 %v1295, %v1299
        %v1302 = vpack.c.bf16 %v1301, %v1300
        %v1303 = vld [vmem:[%s2 + $0x10] sm:$0xf]
        %v1304 = vld [vmem:[%s2 + $0x14] sm:$0xf]
        %v1305 = vld [vmem:[%s2 + $0x18] sm:$0xf]
        %v1306 = vld [vmem:[%s2 + $0x1c] sm:$0xf]
        %v1307 = vld [vmem:[%s2 + $0x20] sm:$0xf]
        %v1308 = vld [vmem:[%s2 + $0x24] sm:$0xf]
        %v1309 = vld [vmem:[%s2 + $0x28] sm:$0xf]
        %v1310 = vld [vmem:[%s2 + $0x2c] sm:$0xf]
        %v1311 = vld [vmem:[%s3 + $0xb] sm:$0x1]
        %v1312 = vlaneseq
        %v1313 = vshrl.u32 %v1312, 7
        %v1314 = vsub.s32 0, %v1313
        %v1315 = vrot.slane %v1311, %v1314
        %v1324 = vunpack.c.l.b16 %v1303
        %v1325 = vunpack.c.l.b16 %v1304
        %v1326 = vunpack.c.l.b16 %v1305
        %v1327 = vunpack.c.l.b16 %v1306
        %v1328 = vunpack.c.l.b16 %v1307
        %v1329 = vunpack.c.l.b16 %v1308
        %v1330 = vunpack.c.l.b16 %v1309
        %v1331 = vunpack.c.l.b16 %v1310
        %v1332 = vpack.c.b16 %v1325, %v1324
        %v1333 = vpack.c.b16 %v1327, %v1326
        %v1334 = vpack.c.b16 %v1329, %v1328
        %v1335 = vpack.c.b16 %v1331, %v1330
        %v1341 = vsel %vm1126, %v1302, 0
        %1343 = vmatprep.subr.bf16.mxu0 0
        %1344 = vmatpush1.bf16.msra.mxu0 %v1332
        %1345 = vmatprep.subr.bf16.mxu0 0
        %1346 = vmatpush1.bf16.msra.mxu0 %v1333
        %1347 = vmatprep.subr.bf16.mxu0 0
        %1348 = vmatpush1.bf16.msra.mxu0 %v1334
        %1349 = vmatprep.subr.bf16.mxu0 0
        %1350 = vmatpush1.bf16.msra.mxu0 %v1335
        %1351 = vmatprep.subr.bf16.mxu0 0
        %1352 = vmatpush1.bf16.msra.mxu0 0
        %1353 = vmatprep.subr.bf16.mxu0 0
        %1354 = vmatpush1.bf16.msra.mxu0 0
        %1355 = vmatprep.subr.bf16.mxu0 0
        %1356 = vmatpush1.bf16.msra.mxu0 0
        %1357 = vmatprep.subr.bf16.mxu0 0
        %1358 = vmatpush1.bf16.msra.mxu0 0
        %1359 = vmatprep.subr.bf16.mxu0 0
        %1360 = vmatpush1.bf16.msra.mxu0 0
        %1361 = vmatprep.subr.bf16.mxu0 0
        %1362 = vmatpush1.bf16.msra.mxu0 0
        %1363 = vmatprep.subr.bf16.mxu0 0
        %1364 = vmatpush1.bf16.msra.mxu0 0
        %1365 = vmatprep.subr.bf16.mxu0 0
        %1366 = vmatpush1.bf16.msra.mxu0 0
        %1367 = vmatprep.subr.bf16.mxu0 0
        %1368 = vmatpush1.bf16.msra.mxu0 0
        %1369 = vmatprep.subr.bf16.mxu0 0
        %1370 = vmatpush1.bf16.msra.mxu0 0
        %1371 = vmatprep.subr.bf16.mxu0 0
        %1372 = vmatpush1.bf16.msra.mxu0 0
        %1373 = vmatprep.subr.bf16.mxu0 0
        %1374 = vmatpush1.bf16.msra.mxu0 0
        %1375 = vmatprep.mubr.bf16.mxu0 0
        %1376 = vmatmul.mubr.bf16.gmra.mrb[0].mxu0 %v1341
        %v1377 = vpop.f32.mrb[0].mxu0
        %v1378 = vadd.f32 %v1315, %v1377
        %v1379 = vpop.f32.mrb[0].mxu0
        %v1380 = vpop.f32.mrb[0].mxu0
        %v1381 = vadd.f32 %v1315, %v1380
        %v1382 = vpop.f32.mrb[0].mxu0
        %1383 = vdwg.mxu0
        %vm1384 = vcmp.gt.f32.partialorder %v1378, 0.0
        %vm1385 = vcmp.gt.f32.partialorder %v1381, 0.0
        %v1386 = vlaneseq
        %v1387 = vshrl.u32 %v1386, 7
        %v1388 = vsub.s32 0, %v1387
        %v1389 = vrot.slane %v1047, %v1388
        %v1390 = vmul.f32 %v1389, %v1378
        %v1391 = vmul.f32 %v1389, %v1381
        %v1392 = vsel %vm1384, %v1378, %v1390
        %v1393 = vsel %vm1385, %v1381, %v1391
        %v1394 = vld [vmem:[%s3 + $0xc] sm:$0x1]
        %v1395 = vld [vmem:[%s3 + $0xd] sm:$0x1]
        %v1396 = vsel %vm228, %v1392, 0.0
        %v1397 = vsel %vm228, %v1393, 0.0
        %v1398 = vadd.f32 %v1396, %v1397
        %1399 = vadd.xlane.f32.xlu0 %v1398
        %v1400 = vpop.xlane.xlu0 %1399
        %v1401 = vrot.slane %v1400, 4
        %v1402 = vadd.f32 %v1400, %v1401
        %v1403 = vrot.slane %v1402, 2
        %v1404 = vadd.f32 %v1402, %v1403
        %v1405 = vrot.slane %v1404, 1
        %v1406 = vadd.f32 %v1404, %v1405
        %s1407 = vtos %v1406
        %s1408 = smul.f32 %s1407, 0.001953125
        %v1409 = vmul.f32 %v1392, %v1392
        %v1410 = vmul.f32 %v1393, %v1393
        %v1411 = vsel %vm228, %v1409, 0.0
        %v1412 = vsel %vm228, %v1410, 0.0
        %v1413 = vadd.f32 %v1411, %v1412
        %1414 = vadd.xlane.f32.xlu0 %v1413
        %v1415 = vpop.xlane.xlu0 %1414
        %v1416 = vrot.slane %v1415, 4
        %v1417 = vadd.f32 %v1415, %v1416
        %v1418 = vrot.slane %v1417, 2
        %v1419 = vadd.f32 %v1417, %v1418
        %v1420 = vrot.slane %v1419, 1
        %v1421 = vadd.f32 %v1419, %v1420
        %s1422 = vtos %v1421
        %s1423 = smul.f32 %s1422, 0.001953125
        %s1424 = smul.f32 %s1408, %s1408
        %s1425 = ssub.f32 %s1423, %s1424
        %s1426 = smax.f32 %s1425, 0.0
        %v1427 = vstv %s1408
        %v1428 = vsub.f32 %v1392, %v1427
        %v1429 = vsub.f32 %v1393, %v1427
        %s1430 = sadd.f32 %s1426, 1e-08
        %v1431 = vstv %s1430
        %v1432 = vrsqrt.pop %v1431
        %s1433 = vtos %v1432
        %v1434 = vstv %s1433
        %v1435 = vmul.f32 %v1428, %v1434
        %v1436 = vmul.f32 %v1429, %v1434
        %v1437 = vlaneseq
        %v1438 = vshrl.u32 %v1437, 7
        %v1439 = vsub.s32 0, %v1438
        %v1440 = vrot.slane %v1394, %v1439
        %v1441 = vmul.f32 %v1435, %v1440
        %v1442 = vmul.f32 %v1436, %v1440
        %v1443 = vlaneseq
        %v1444 = vshrl.u32 %v1443, 7
        %v1445 = vsub.s32 0, %v1444
        %v1446 = vrot.slane %v1395, %v1445
        %v1447 = vadd.f32 %v1441, %v1446
        %v1448 = vadd.f32 %v1442, %v1446
        %v1449 = vadd.f32 %v1447, %v1043
        %v1450 = vadd.f32 %v1448, %v1044
        %1451 = vst.msk [vmem:[%s217] sm:$0xff] %vm228, %v1449
        %1452 = vst.msk [vmem:[%s217 + $0x8] sm:$0xff] %vm228, %v1450
        %s1453 = sand.u32 %s137, 1
        %s1454 = scalar_lea.sflag [#allocation3], %s1453
        %s1455 = sand.u32 %s137, 1
        %s1456 = smul.addr %s1455, 16
        %s1457 = scalar_lea.vmem [#allocation2], %s1456
        // Predicated region
        $region41: #{video_attention_forward.1} parent=39 // pred_check
          %p1458 = pneg %p147
        $region42: #{video_attention_forward.1} parent=39 // pred_check_branch
          %1460 = sbr.rel (%p1458) target = $region44
        $region43: #{video_attention_forward.1} parent=39 // pred_region
          %s1462 = ssub.s32 256, 256
          %1463 = vsyncadd %s1454, %s1462
          %s1464 = smul.addr %s19, 2
          %s1465 = smul.addr %s1464, 128
          %s1466 = scalar_lea.hbm %s5, %s1465
          %s1467 = sshll.u32 %s1457, 4
          %s1468 = int_to_ptr.vmem [resolvable:$true] %s1467
          %1473 = dma.vmem_to_hbm [thread:$0]  %s1468, 256, %s1466, %s1454, 128, 128, 8
        $region44: #{video_attention_forward.1} parent=39 // pred_fallthru
          _
      $region40: #{video_attention_forward.1} parent=5 // pred_fallthru
        _
      %p1474 = scmp.le.s32.totalorder 2, %s14
      // Predicated region
      $region45: #{video_attention_forward.1} parent=5 // pred_check
        %p1475 = pneg %p1474
      $region46: #{video_attention_forward.1} parent=5 // pred_check_branch
        %1477 = sbr.rel (%p1475) target = $region48
      $region47: #{video_attention_forward.1} parent=5 // pred_region
        %s1478 = ssub.s32 %s14, 2
        // Predicated region
        $region49: #{video_attention_forward.1} parent=47 // pred_check
          %p1479 = pneg %p153
        $region50: #{video_attention_forward.1} parent=47 // pred_check_branch
          %1481 = sbr.rel (%p1479) target = $region52
        $region51: #{video_attention_forward.1} parent=47 // pred_region
          %s1482 = sand.u32 %s138, 1
          %s1483 = scalar_lea.sflag [#allocation3], %s1482
          %s1484 = sand.u32 %s138, 1
          %s1485 = smul.addr %s1484, 16
          %s1486 = scalar_lea.vmem [#allocation2], %s1485
          %1487 = dma.done %s1483, 256
        $region52: #{video_attention_forward.1} parent=47 // pred_fallthru
          _
      $region48: #{video_attention_forward.1} parent=5 // pred_fallthru
        _
    $region6: #{video_attention_forward.1} parent=1 // loop_footer
      %s18 = sadd.s32 1, %s14
    $region7: #{video_attention_forward.1} parent=1 // loop_footer_branch
      %13 = sbr.rel target = $region3
    $region8: #{video_attention_forward.1} parent=1 // loop_exit
      _
    %1488 = vsyncpa [#allocation3], 1
    %s1489 = scalar_lea.sflag [#allocation3], 1
    %1490 = vsyncpa %s1489, 1

</llo_original>
